<compile_context>
chip_gen: v7x
topology: tpu7x:2x2x1
jax: 0.10.0
libtpu: 0.0.40
codegen_flags: <defaults>
</compile_context>

<pallas_src>
import functools

import jax
import jax.numpy as jnp
from jax import lax
from jax.experimental import pallas as pl
from jax.experimental.pallas import tpu as pltpu


# ----------------------------- VMEM sizing helpers ----------------------------------

def _vmem_budget_bytes():
    """Physical VMEM per TensorCore (128 MiB v5e/v6e, 64 MiB v7x); safe fallback."""
    try:
        return int(pltpu.get_tpu_info().vmem_capacity_bytes)
    except Exception:
        return 64 * 1024 * 1024


def _vmem_limit_bytes(budget):
    # 3/4 of physical: 96 MiB on 128-MiB parts (v5e/v6e), 48 MiB on 64-MiB v7x.
    return int(budget * 3 // 4)


def _pick_token_chunk(N, C, limit):
    """Largest token chunk Nc (full N, or a multiple-of-8 divisor) fitting VMEM."""
    # Resident (double-buffered) inputs: bf16 (3,C,C) weight, f32 (C,C) mask, temps,
    # plus persistent scratch: 2x (C,C) grams + 4x (1,C) sums.
    resident = 2 * (3 * C * C * 2 + C * C * 4 + 2 * C * 4) + 2 * C * C * 4 + 4 * C * 4
    budget = int(max(limit - resident, limit // 4) * 0.9)
    cands = [N] + [t for t in (8192, 4096, 2048, 1024, 512, 256, 128, 64, 32, 16, 8)
                   if t < N and N % t == 0]
    for nc_tok in cands:
        # x1/x2 chunks double-buffered (4) + out block (2) + live q/k/v temporaries (~8).
        need = 14 * nc_tok * C * 4
        if need <= budget:
            return nc_tok
    return cands[-1]


# ----------------------------- fused projection + jump (cross) attention ------------

def _jump_attn_kernel(x1_ref, x2_ref, w_ref, mask_ref, t1_ref, t2_ref, o_ref,
                      sq1, sk1, sq2, sk2, g1, g2, *, nc):
    """Grid = (B, 2*nc).  One batch element per outer step, token chunks inner.

    x{1,2}_ref: (1, Nc, C) f32  input token chunk (same chunk revisited in phase 2).
    w_ref:      (3, C, C) bf16  q/k/v projection weights (resident).
    mask_ref:   (C, C)    f32   additive same-head mask (0 / -1e30, resident).
    t{1,2}_ref: (1, C)    f32   per-channel temperatures (head-major, resident).
    o_ref:      (1, Nc, C) f32  output chunk, written directly in (B, N, C) layout.
    scratch:    sq1/sk1/sq2/sk2 (1, C) f32  running sum-of-squares over tokens,
                g1/g2 (C, C) f32  raw token-grams, overwritten with softmax probs.
    """
    c = pl.program_id(1)
    f32 = jnp.float32
    bf16 = jnp.bfloat16

    @pl.when(c == 0)
    def _init():
        sq1[...] = jnp.zeros_like(sq1)
        sk1[...] = jnp.zeros_like(sk1)
        sq2[...] = jnp.zeros_like(sq2)
        sk2[...] = jnp.zeros_like(sk2)
        g1[...] = jnp.zeros_like(g1)
        g2[...] = jnp.zeros_like(g2)

    # bf16 MXU operands, f32 accumulation everywhere below.
    x1 = x1_ref[0].astype(bf16)                       # (Nc, C)
    x2 = x2_ref[0].astype(bf16)

    tok_contract = (((0,), (0,)), ((), ()))           # (Nc,C) x (Nc,C) -> (C,C)  q^T k
    chan_contract = (((1,), (1,)), ((), ()))          # (Nc,C) x (C,C)  -> (Nc,C) v a^T

    # ---- Phase 1: accumulate per-channel norms and raw grams over token chunks ----
    @pl.when(c < nc)
    def _accumulate():
        q1 = jnp.dot(x1, w_ref[0], preferred_element_type=f32)
        k1 = jnp.dot(x1, w_ref[1], preferred_element_type=f32)
        q2 = jnp.dot(x2, w_ref[0], preferred_element_type=f32)
        k2 = jnp.dot(x2, w_ref[1], preferred_element_type=f32)
        sq1[...] += jnp.sum(q1 * q1, axis=0, keepdims=True)
        sk1[...] += jnp.sum(k1 * k1, axis=0, keepdims=True)
        sq2[...] += jnp.sum(q2 * q2, axis=0, keepdims=True)
        sk2[...] += jnp.sum(k2 * k2, axis=0, keepdims=True)
        g1[...] += lax.dot_general(q1.astype(bf16), k1.astype(bf16), tok_contract,
                                   preferred_element_type=f32)
        g2[...] += lax.dot_general(q2.astype(bf16), k2.astype(bf16), tok_contract,
                                   preferred_element_type=f32)

    # ---- Finalize: normalize, temperature-scale, head-masked softmax (in place) ----
    @pl.when(c == nc)
    def _finalize():
        eps_sq = f32(1e-24)                           # (F.normalize eps = 1e-12)**2

        def masked_softmax(g_scr, s_q, s_k, t_row):
            r_q = lax.rsqrt(jnp.maximum(s_q[...], eps_sq))          # (1, C) EUP rsqrt
            r_k = lax.rsqrt(jnp.maximum(s_k[...], eps_sq))          # (1, C)
            row_scale = jnp.transpose(r_q * t_row[...])             # (C, 1)
            s = g_scr[...] * r_k * row_scale + mask_ref[...]
            s = s - jnp.max(s, axis=-1, keepdims=True)
            e = jnp.exp(s)                            # off-head: exp(-1e30 - m) == 0
            g_scr[...] = e / jnp.sum(e, axis=-1, keepdims=True)     # exact divide
        masked_softmax(g1, sq1, sk1, t1_ref)
        masked_softmax(g2, sq2, sk2, t2_ref)
        # TODO(synk): attn_drop (Dropout(0.1)) is identity in eval mode; training-mode
        # dropout via pltpu.prng_* is not implemented.

    # ---- Phase 2: per-chunk v projection and output emission ----------------------
    @pl.when(c >= nc)
    def _emit():
        v1 = jnp.dot(x1, w_ref[2], preferred_element_type=f32)
        v2 = jnp.dot(x2, w_ref[2], preferred_element_type=f32)
        a1 = g1[...].astype(bf16)
        a2 = g2[...].astype(bf16)
        o1 = lax.dot_general(v2.astype(bf16), a1, chan_contract,
                             preferred_element_type=f32)
        o2 = lax.dot_general(v1.astype(bf16), a2, chan_contract,
                             preferred_element_type=f32)
        o_ref[0] = (o1 + o2).astype(o_ref.dtype)      # == x_1 + x_2


def jump_attention(x1, x2, w_qkv, temperature, temperature2, num_heads):
    """Forward pass of JumpAttention.  x1, x2: (B, N, C) float32 -> (B, N, C)."""
    B, N, C = x1.shape
    H = num_heads
    d = C // H

    x1 = x1.astype(jnp.float32)
    x2 = x2.astype(jnp.float32)

    # nn.Linear weight (3C, C) -> (3, C_in, C_out) bf16 (q/k/v on the major axis:
    # major-axis ref slices in-kernel, no unaligned column slicing of an (N,3C) tile).
    w3 = jnp.transpose(w_qkv.astype(jnp.float32).reshape(3, C, C),
                       (0, 2, 1)).astype(jnp.bfloat16)

    # Additive same-head mask for the fused block-diagonal (C, C) softmax (hoisted).
    head_id = jnp.arange(C, dtype=jnp.int32) // d
    mask = jnp.where(head_id[:, None] == head_id[None, :], 0.0, -1e30
                     ).astype(jnp.float32)

    # temperature (H,1,1) -> one scale per channel column (head-major layout).
    t1e = jnp.repeat(temperature.reshape(H).astype(jnp.float32), d).reshape(1, C)
    t2e = jnp.repeat(temperature2.reshape(H).astype(jnp.float32), d).reshape(1, C)

    budget = _vmem_budget_bytes()
    limit = _vmem_limit_bytes(budget)
    Nc = _pick_token_chunk(N, C, limit)
    nc = N // Nc

    grid = (B, 2 * nc)
    x_block = (1, Nc, C)
    x_spec = pl.BlockSpec(x_block, lambda b, c: (b, c % nc, 0))
    w_spec = pl.BlockSpec((3, C, C), lambda b, c: (0, 0, 0))
    m_spec = pl.BlockSpec((C, C), lambda b, c: (0, 0))
    t_spec = pl.BlockSpec((1, C), lambda b, c: (0, 0))
    out_spec = pl.BlockSpec(x_block, lambda b, c: (b, jnp.maximum(c - nc, 0), 0))

    cost = pl.CostEstimate(
        flops=int(20 * B * N * C * C),                       # proj + grams + v·a^T
        transcendentals=int(2 * B * C * C + 4 * B * C),
        bytes_accessed=int(4 * (2 * 2 * B * N * C + B * N * C)  # x read twice + out
                           + 2 * 3 * C * C + 4 * C * C + 4 * 4 * C),
    )

    # TODO(synk): for small-C stages the (.., C<128) output blocks use masked stores;
    # a lane-dense (B, N*C) output view (and bf16 stores) is a further HBM-write win.
    out = pl.pallas_call(
        functools.partial(_jump_attn_kernel, nc=nc),
        out_shape=jax.ShapeDtypeStruct((B, N, C), jnp.float32),
        grid=grid,
        in_specs=[x_spec, x_spec, w_spec, m_spec, t_spec, t_spec],
        out_specs=out_spec,
        scratch_shapes=[pltpu.VMEM((1, C), jnp.float32)] * 4
                      + [pltpu.VMEM((C, C), jnp.float32)] * 2,
        compiler_params=pltpu.CompilerParams(
            dimension_semantics=("parallel", "arbitrary"),
            vmem_limit_bytes=limit),
        cost_estimate=cost,
    )(x1, x2, w3, mask, t1e, t2e)
    return out


# ----------------------------- pure-JAX reference (mirrors PyTorch) -----------------

def jump_attention_ref(x1, x2, w_qkv, temperature, temperature2, num_heads):
    B, N, C = x1.shape
    H = num_heads
    d = C // H

    def proj(x):
        q = (x @ w_qkv.T).reshape(B, N, 3, H, d)
        q = jnp.transpose(q, (2, 0, 3, 1, 4))
        return q[0], q[1], q[2]

    def tdn(a):
        return jnp.swapaxes(a, -2, -1)

    def norm(a):
        n = jnp.sqrt(jnp.sum(a * a, axis=-1, keepdims=True))
        return a / jnp.maximum(n, 1e-12)

    q1, k1, v1 = proj(x1)
    q2, k2, v2 = proj(x2)
    q1, k1, v1 = tdn(q1), tdn(k1), tdn(v1)
    q2, k2, v2 = tdn(q2), tdn(k2), tdn(v2)
    q1, k1, q2, k2 = norm(q1), norm(k1), norm(q2), norm(k2)

    attn1 = jax.nn.softmax(q1 @ tdn(k1) * temperature[None], axis=-1)
    x_1 = jnp.transpose(attn1 @ v2, (0, 3, 1, 2)).reshape(-1, N, C)
    attn2 = jax.nn.softmax(q2 @ tdn(k2) * temperature2[None], axis=-1)
    x_2 = jnp.transpose(attn2 @ v1, (0, 3, 1, 2)).reshape(-1, N, C)
    return x_1 + x_2


if __name__ == "__main__":
    B, N, C, H = 2, 8, 32, 4  # d = C // H = 8

    key = jax.random.PRNGKey(0)
    k_x1, k_x2, k_w = jax.random.split(key, 3)

    x1 = jax.random.normal(k_x1, (B, N, C), dtype=jnp.float32)
    x2 = jax.random.normal(k_x2, (B, N, C), dtype=jnp.float32)
    # nn.Linear(hidden, hidden*3, bias=False): weight shape (3C, C)
    w_qkv = jax.random.normal(k_w, (3 * C, C), dtype=jnp.float32) * (1.0 / jnp.sqrt(C))
    # learnable per-head temperatures (init is ones; use varied values to exercise them)
    temperature = (1.0 + 0.25 * jnp.arange(H, dtype=jnp.float32)).reshape(H, 1, 1)
    temperature2 = (1.0 + 0.10 * jnp.arange(H, dtype=jnp.float32)).reshape(H, 1, 1)

    out = jax.block_until_ready(
        jump_attention(x1, x2, w_qkv, temperature, temperature2, H))
    ref = jump_attention_ref(x1, x2, w_qkv, temperature, temperature2, H)

    assert out.shape == (B, N, C), out.shape
    # Softmax is exact (no approx reciprocal).  Remaining tolerance covers bf16 MXU
    # operands (f32 accumulation) in the projection, gram and output matmuls
    # (observed/expected max abs error ~1e-2 at these magnitudes).
    assert jnp.allclose(out, ref, atol=3e-2, rtol=3e-2), (
        float(jnp.max(jnp.abs(out - ref))))

    print("KERNEL_OK")
</pallas_src>

<mosaic_0001>
module attributes {stable_mosaic.version = 11 : i64} {
  func.func @_jump_attn_kernel(%arg0: i32, %arg1: i32, %arg2: memref<1x8x32xf32, #tpu.memory_space<vmem>>, %arg3: memref<1x8x32xf32, #tpu.memory_space<vmem>>, %arg4: memref<3x32x32xbf16, #tpu.memory_space<vmem>>, %arg5: memref<32x32xf32, #tpu.memory_space<vmem>>, %arg6: memref<1x32xf32, #tpu.memory_space<vmem>>, %arg7: memref<1x32xf32, #tpu.memory_space<vmem>>, %arg8: memref<1x8x32xf32, #tpu.memory_space<vmem>>, %arg9: memref<1x32xf32, #tpu.memory_space<vmem>>, %arg10: memref<1x32xf32, #tpu.memory_space<vmem>>, %arg11: memref<1x32xf32, #tpu.memory_space<vmem>>, %arg12: memref<1x32xf32, #tpu.memory_space<vmem>>, %arg13: memref<32x32xf32, #tpu.memory_space<vmem>>, %arg14: memref<32x32xf32, #tpu.memory_space<vmem>>) attributes {dimension_semantics = [#tpu.dimension_semantics<parallel>, #tpu.dimension_semantics<arbitrary>], iteration_bounds = array<i64: 2, 2>, scalar_prefetch = 0 : i64, scratch_operands = 6 : i64, tpu.core_type = #tpu.core_type<tc>, window_params = [{transform_indices = @transform_0, window_bounds = array<i64: 1, 8, 32>}, {transform_indices = @transform_1, window_bounds = array<i64: 1, 8, 32>}, {pipeline_mode = #tpu.pipeline_mode<synchronous>, transform_indices = @transform_2, window_bounds = array<i64: 3, 32, 32>}, {pipeline_mode = #tpu.pipeline_mode<synchronous>, transform_indices = @transform_3, window_bounds = array<i64: 32, 32>}, {pipeline_mode = #tpu.pipeline_mode<synchronous>, transform_indices = @transform_4, window_bounds = array<i64: 1, 32>}, {pipeline_mode = #tpu.pipeline_mode<synchronous>, transform_indices = @transform_5, window_bounds = array<i64: 1, 32>}, {transform_indices = @transform_6, window_bounds = array<i64: 1, 8, 32>}]} {
    %c0_i32 = arith.constant 0 : i32
    %0 = arith.cmpi eq, %arg1, %c0_i32 : i32
    %1 = arith.extui %0 : i1 to i32
    %c0_i32_0 = arith.constant 0 : i32
    %2 = arith.cmpi ne, %1, %c0_i32_0 : i32
    scf.if %2 {
      %cst = arith.constant 0.000000e+00 : f32
      %18 = vector.broadcast %cst : f32 to vector<1x32xf32>
      %c0_11 = arith.constant 0 : index
      %c0_12 = arith.constant 0 : index
      %19 = vector.load %arg9[%c0_11, %c0_12] : memref<1x32xf32, #tpu.memory_space<vmem>>, vector<1x32xf32>
      tpu.vector_store %arg9[%c0_11, %c0_12], %18 {strides = array<i32>} : memref<1x32xf32, #tpu.memory_space<vmem>>, vector<1x32xf32>,
      %cst_13 = arith.constant 0.000000e+00 : f32
      %20 = vector.broadcast %cst_13 : f32 to vector<1x32xf32>
      %c0_14 = arith.constant 0 : index
      %c0_15 = arith.constant 0 : index
      %21 = vector.load %arg10[%c0_14, %c0_15] : memref<1x32xf32, #tpu.memory_space<vmem>>, vector<1x32xf32>
      tpu.vector_store %arg10[%c0_14, %c0_15], %20 {strides = array<i32>} : memref<1x32xf32, #tpu.memory_space<vmem>>, vector<1x32xf32>,
      %cst_16 = arith.constant 0.000000e+00 : f32
      %22 = vector.broadcast %cst_16 : f32 to vector<1x32xf32>
      %c0_17 = arith.constant 0 : index
      %c0_18 = arith.constant 0 : index
      %23 = vector.load %arg11[%c0_17, %c0_18] : memref<1x32xf32, #tpu.memory_space<vmem>>, vector<1x32xf32>
      tpu.vector_store %arg11[%c0_17, %c0_18], %22 {strides = array<i32>} : memref<1x32xf32, #tpu.memory_space<vmem>>, vector<1x32xf32>,
      %cst_19 = arith.constant 0.000000e+00 : f32
      %24 = vector.broadcast %cst_19 : f32 to vector<1x32xf32>
      %c0_20 = arith.constant 0 : index
      %c0_21 = arith.constant 0 : index
      %25 = vector.load %arg12[%c0_20, %c0_21] : memref<1x32xf32, #tpu.memory_space<vmem>>, vector<1x32xf32>
      tpu.vector_store %arg12[%c0_20, %c0_21], %24 {strides = array<i32>} : memref<1x32xf32, #tpu.memory_space<vmem>>, vector<1x32xf32>,
      %cst_22 = arith.constant 0.000000e+00 : f32
      %26 = vector.broadcast %cst_22 : f32 to vector<32x32xf32>
      %c0_23 = arith.constant 0 : index
      %c0_24 = arith.constant 0 : index
      %27 = vector.load %arg13[%c0_23, %c0_24] : memref<32x32xf32, #tpu.memory_space<vmem>>, vector<32x32xf32>
      tpu.vector_store %arg13[%c0_23, %c0_24], %26 {strides = array<i32>} : memref<32x32xf32, #tpu.memory_space<vmem>>, vector<32x32xf32>,
      %cst_25 = arith.constant 0.000000e+00 : f32
      %28 = vector.broadcast %cst_25 : f32 to vector<32x32xf32>
      %c0_26 = arith.constant 0 : index
      %c0_27 = arith.constant 0 : index
      %29 = vector.load %arg14[%c0_26, %c0_27] : memref<32x32xf32, #tpu.memory_space<vmem>>, vector<32x32xf32>
      tpu.vector_store %arg14[%c0_26, %c0_27], %28 {strides = array<i32>} : memref<32x32xf32, #tpu.memory_space<vmem>>, vector<32x32xf32>,
    } else {
    }
    %c0 = arith.constant 0 : index
    %c0_1 = arith.constant 0 : index
    %c0_2 = arith.constant 0 : index
    %3 = vector.load %arg2[%c0, %c0_1, %c0_2] : memref<1x8x32xf32, #tpu.memory_space<vmem>>, vector<1x8x32xf32>
    %4 = vector.shape_cast %3 : vector<1x8x32xf32> to vector<8x32xf32>
    %5 = arith.truncf %4 : vector<8x32xf32> to vector<8x32xbf16>
    %c0_3 = arith.constant 0 : index
    %c0_4 = arith.constant 0 : index
    %c0_5 = arith.constant 0 : index
    %6 = vector.load %arg3[%c0_3, %c0_4, %c0_5] : memref<1x8x32xf32, #tpu.memory_space<vmem>>, vector<1x8x32xf32>
    %7 = vector.shape_cast %6 : vector<1x8x32xf32> to vector<8x32xf32>
    %8 = arith.truncf %7 : vector<8x32xf32> to vector<8x32xbf16>
    %c1_i32 = arith.constant 1 : i32
    %9 = arith.cmpi slt, %arg1, %c1_i32 : i32
    %10 = arith.extui %9 : i1 to i32
    %c0_i32_6 = arith.constant 0 : i32
    %11 = arith.cmpi ne, %10, %c0_i32_6 : i32
    scf.if %11 {
      %c0_11 = arith.constant 0 : index
      %c0_12 = arith.constant 0 : index
      %c0_13 = arith.constant 0 : index
      %18 = vector.load %arg4[%c0_11, %c0_12, %c0_13] : memref<3x32x32xbf16, #tpu.memory_space<vmem>>, vector<1x32x32xbf16>
      %19 = vector.shape_cast %18 : vector<1x32x32xbf16> to vector<32x32xbf16>
      %cst = arith.constant dense<0.000000e+00> : vector<8x32xf32>
      %20 = tpu.matmul %5, %19, %cst {dimension_numbers = #tpu.dot_dimension_numbers<[1], [0], [0], [1], [0, 0, 1, 1], [], []>} : vector<8x32xbf16>, vector<32x32xbf16>, vector<8x32xf32> -> vector<8x32xf32>
      %c1 = arith.constant 1 : index
      %c0_14 = arith.constant 0 : index
      %c0_15 = arith.constant 0 : index
      %21 = vector.load %arg4[%c1, %c0_14, %c0_15] : memref<3x32x32xbf16, #tpu.memory_space<vmem>>, vector<1x32x32xbf16>
      %22 = vector.shape_cast %21 : vector<1x32x32xbf16> to vector<32x32xbf16>
      %cst_16 = arith.constant dense<0.000000e+00> : vector<8x32xf32>
      %23 = tpu.matmul %5, %22, %cst_16 {dimension_numbers = #tpu.dot_dimension_numbers<[1], [0], [0], [1], [0, 0, 1, 1], [], []>} : vector<8x32xbf16>, vector<32x32xbf16>, vector<8x32xf32> -> vector<8x32xf32>
      %c0_17 = arith.constant 0 : index
      %c0_18 = arith.constant 0 : index
      %c0_19 = arith.constant 0 : index
      %24 = vector.load %arg4[%c0_17, %c0_18, %c0_19] : memref<3x32x32xbf16, #tpu.memory_space<vmem>>, vector<1x32x32xbf16>
      %25 = vector.shape_cast %24 : vector<1x32x32xbf16> to vector<32x32xbf16>
      %cst_20 = arith.constant dense<0.000000e+00> : vector<8x32xf32>
      %26 = tpu.matmul %8, %25, %cst_20 {dimension_numbers = #tpu.dot_dimension_numbers<[1], [0], [0], [1], [0, 0, 1, 1], [], []>} : vector<8x32xbf16>, vector<32x32xbf16>, vector<8x32xf32> -> vector<8x32xf32>
      %c1_21 = arith.constant 1 : index
      %c0_22 = arith.constant 0 : index
      %c0_23 = arith.constant 0 : index
      %27 = vector.load %arg4[%c1_21, %c0_22, %c0_23] : memref<3x32x32xbf16, #tpu.memory_space<vmem>>, vector<1x32x32xbf16>
      %28 = vector.shape_cast %27 : vector<1x32x32xbf16> to vector<32x32xbf16>
      %cst_24 = arith.constant dense<0.000000e+00> : vector<8x32xf32>
      %29 = tpu.matmul %8, %28, %cst_24 {dimension_numbers = #tpu.dot_dimension_numbers<[1], [0], [0], [1], [0, 0, 1, 1], [], []>} : vector<8x32xbf16>, vector<32x32xbf16>, vector<8x32xf32> -> vector<8x32xf32>
      %c0_25 = arith.constant 0 : index
      %c0_26 = arith.constant 0 : index
      %30 = vector.load %arg9[%c0_25, %c0_26] : memref<1x32xf32, #tpu.memory_space<vmem>>, vector<1x32xf32>
      %31 = arith.mulf %20, %20 : vector<8x32xf32>
      %cst_27 = arith.constant dense<0.000000e+00> : vector<32xf32>
      %32 = vector.multi_reduction <add>, %31, %cst_27 [0] : vector<8x32xf32> to vector<32xf32>
      %33 = vector.shape_cast %32 : vector<32xf32> to vector<1x32xf32>
      %34 = arith.addf %30, %33 : vector<1x32xf32>
      %c0_28 = arith.constant 0 : index
      %c0_29 = arith.constant 0 : index
      %35 = vector.load %arg9[%c0_28, %c0_29] : memref<1x32xf32, #tpu.memory_space<vmem>>, vector<1x32xf32>
      tpu.vector_store %arg9[%c0_28, %c0_29], %34 {strides = array<i32>} : memref<1x32xf32, #tpu.memory_space<vmem>>, vector<1x32xf32>,
      %c0_30 = arith.constant 0 : index
      %c0_31 = arith.constant 0 : index
      %36 = vector.load %arg10[%c0_30, %c0_31] : memref<1x32xf32, #tpu.memory_space<vmem>>, vector<1x32xf32>
      %37 = arith.mulf %23, %23 : vector<8x32xf32>
      %cst_32 = arith.constant dense<0.000000e+00> : vector<32xf32>
      %38 = vector.multi_reduction <add>, %37, %cst_32 [0] : vector<8x32xf32> to vector<32xf32>
      %39 = vector.shape_cast %38 : vector<32xf32> to vector<1x32xf32>
      %40 = arith.addf %36, %39 : vector<1x32xf32>
      %c0_33 = arith.constant 0 : index
      %c0_34 = arith.constant 0 : index
      %41 = vector.load %arg10[%c0_33, %c0_34] : memref<1x32xf32, #tpu.memory_space<vmem>>, vector<1x32xf32>
      tpu.vector_store %arg10[%c0_33, %c0_34], %40 {strides = array<i32>} : memref<1x32xf32, #tpu.memory_space<vmem>>, vector<1x32xf32>,
      %c0_35 = arith.constant 0 : index
      %c0_36 = arith.constant 0 : index
      %42 = vector.load %arg11[%c0_35, %c0_36] : memref<1x32xf32, #tpu.memory_space<vmem>>, vector<1x32xf32>
      %43 = arith.mulf %26, %26 : vector<8x32xf32>
      %cst_37 = arith.constant dense<0.000000e+00> : vector<32xf32>
      %44 = vector.multi_reduction <add>, %43, %cst_37 [0] : vector<8x32xf32> to vector<32xf32>
      %45 = vector.shape_cast %44 : vector<32xf32> to vector<1x32xf32>
      %46 = arith.addf %42, %45 : vector<1x32xf32>
      %c0_38 = arith.constant 0 : index
      %c0_39 = arith.constant 0 : index
      %47 = vector.load %arg11[%c0_38, %c0_39] : memref<1x32xf32, #tpu.memory_space<vmem>>, vector<1x32xf32>
      tpu.vector_store %arg11[%c0_38, %c0_39], %46 {strides = array<i32>} : memref<1x32xf32, #tpu.memory_space<vmem>>, vector<1x32xf32>,
      %c0_40 = arith.constant 0 : index
      %c0_41 = arith.constant 0 : index
      %48 = vector.load %arg12[%c0_40, %c0_41] : memref<1x32xf32, #tpu.memory_space<vmem>>, vector<1x32xf32>
      %49 = arith.mulf %29, %29 : vector<8x32xf32>
      %cst_42 = arith.constant dense<0.000000e+00> : vector<32xf32>
      %50 = vector.multi_reduction <add>, %49, %cst_42 [0] : vector<8x32xf32> to vector<32xf32>
      %51 = vector.shape_cast %50 : vector<32xf32> to vector<1x32xf32>
      %52 = arith.addf %48, %51 : vector<1x32xf32>
      %c0_43 = arith.constant 0 : index
      %c0_44 = arith.constant 0 : index
      %53 = vector.load %arg12[%c0_43, %c0_44] : memref<1x32xf32, #tpu.memory_space<vmem>>, vector<1x32xf32>
      tpu.vector_store %arg12[%c0_43, %c0_44], %52 {strides = array<i32>} : memref<1x32xf32, #tpu.memory_space<vmem>>, vector<1x32xf32>,
      %c0_45 = arith.constant 0 : index
      %c0_46 = arith.constant 0 : index
      %54 = vector.load %arg13[%c0_45, %c0_46] : memref<32x32xf32, #tpu.memory_space<vmem>>, vector<32x32xf32>
      %55 = arith.truncf %20 : vector<8x32xf32> to vector<8x32xbf16>
      %56 = arith.truncf %23 : vector<8x32xf32> to vector<8x32xbf16>
      %cst_47 = arith.constant dense<0.000000e+00> : vector<32x32xf32>
      %57 = tpu.matmul %55, %56, %cst_47 {dimension_numbers = #tpu.dot_dimension_numbers<[0], [0], [1], [1], [0, 1, 1, 1], [], []>} : vector<8x32xbf16>, vector<8x32xbf16>, vector<32x32xf32> -> vector<32x32xf32>
      %58 = arith.addf %54, %57 : vector<32x32xf32>
      %c0_48 = arith.constant 0 : index
      %c0_49 = arith.constant 0 : index
      %59 = vector.load %arg13[%c0_48, %c0_49] : memref<32x32xf32, #tpu.memory_space<vmem>>, vector<32x32xf32>
      tpu.vector_store %arg13[%c0_48, %c0_49], %58 {strides = array<i32>} : memref<32x32xf32, #tpu.memory_space<vmem>>, vector<32x32xf32>,
      %c0_50 = arith.constant 0 : index
      %c0_51 = arith.constant 0 : index
      %60 = vector.load %arg14[%c0_50, %c0_51] : memref<32x32xf32, #tpu.memory_space<vmem>>, vector<32x32xf32>
      %61 = arith.truncf %26 : vector<8x32xf32> to vector<8x32xbf16>
      %62 = arith.truncf %29 : vector<8x32xf32> to vector<8x32xbf16>
      %cst_52 = arith.constant dense<0.000000e+00> : vector<32x32xf32>
      %63 = tpu.matmul %61, %62, %cst_52 {dimension_numbers = #tpu.dot_dimension_numbers<[0], [0], [1], [1], [0, 1, 1, 1], [], []>} : vector<8x32xbf16>, vector<8x32xbf16>, vector<32x32xf32> -> vector<32x32xf32>
      %64 = arith.addf %60, %63 : vector<32x32xf32>
      %c0_53 = arith.constant 0 : index
      %c0_54 = arith.constant 0 : index
      %65 = vector.load %arg14[%c0_53, %c0_54] : memref<32x32xf32, #tpu.memory_space<vmem>>, vector<32x32xf32>
      tpu.vector_store %arg14[%c0_53, %c0_54], %64 {strides = array<i32>} : memref<32x32xf32, #tpu.memory_space<vmem>>, vector<32x32xf32>,
    } else {
    }
    %c1_i32_7 = arith.constant 1 : i32
    %12 = arith.cmpi eq, %arg1, %c1_i32_7 : i32
    %13 = arith.extui %12 : i1 to i32
    %c0_i32_8 = arith.constant 0 : i32
    %14 = arith.cmpi ne, %13, %c0_i32_8 : i32
    scf.if %14 {
      %c0_11 = arith.constant 0 : index
      %c0_12 = arith.constant 0 : index
      %18 = vector.load %arg9[%c0_11, %c0_12] : memref<1x32xf32, #tpu.memory_space<vmem>>, vector<1x32xf32>
      %cst = arith.constant 1.000000e-24 : f32
      %19 = vector.broadcast %cst : f32 to vector<1x32xf32>
      %20 = arith.maximumf %18, %19 : vector<1x32xf32>
      %21 = math.rsqrt %20 : vector<1x32xf32>
      %c0_13 = arith.constant 0 : index
      %c0_14 = arith.constant 0 : index
      %22 = vector.load %arg10[%c0_13, %c0_14] : memref<1x32xf32, #tpu.memory_space<vmem>>, vector<1x32xf32>
      %cst_15 = arith.constant 1.000000e-24 : f32
      %23 = vector.broadcast %cst_15 : f32 to vector<1x32xf32>
      %24 = arith.maximumf %22, %23 : vector<1x32xf32>
      %25 = math.rsqrt %24 : vector<1x32xf32>
      %c0_16 = arith.constant 0 : index
      %c0_17 = arith.constant 0 : index
      %26 = vector.load %arg6[%c0_16, %c0_17] : memref<1x32xf32, #tpu.memory_space<vmem>>, vector<1x32xf32>
      %27 = arith.mulf %21, %26 : vector<1x32xf32>
      %28 = tpu.transpose %27, [1, 0] : vector<1x32xf32> -> vector<32x1xf32>
      %c0_18 = arith.constant 0 : index
      %c0_19 = arith.constant 0 : index
      %29 = vector.load %arg13[%c0_18, %c0_19] : memref<32x32xf32, #tpu.memory_space<vmem>>, vector<32x32xf32>
      %30 = vector.broadcast %25 : vector<1x32xf32> to vector<32x32xf32>
      %31 = arith.mulf %29, %30 : vector<32x32xf32>
      %32 = vector.broadcast %28 : vector<32x1xf32> to vector<32x32xf32>
      %33 = arith.mulf %31, %32 : vector<32x32xf32>
      %c0_20 = arith.constant 0 : index
      %c0_21 = arith.constant 0 : index
      %34 = vector.load %arg5[%c0_20, %c0_21] : memref<32x32xf32, #tpu.memory_space<vmem>>, vector<32x32xf32>
      %35 = arith.addf %33, %34 : vector<32x32xf32>
      %cst_22 = arith.constant dense<0xFF800000> : vector<32xf32>
      %36 = vector.multi_reduction <maximumf>, %35, %cst_22 [1] : vector<32x32xf32> to vector<32xf32>
      %37 = vector.shape_cast %36 : vector<32xf32> to vector<32x1xf32>
      %38 = vector.broadcast %37 : vector<32x1xf32> to vector<32x32xf32>
      %39 = arith.subf %35, %38 : vector<32x32xf32>
      %40 = math.exp %39 : vector<32x32xf32>
      %cst_23 = arith.constant dense<0.000000e+00> : vector<32xf32>
      %41 = vector.multi_reduction <add>, %40, %cst_23 [1] : vector<32x32xf32> to vector<32xf32>
      %42 = vector.shape_cast %41 : vector<32xf32> to vector<32x1xf32>
      %43 = vector.broadcast %42 : vector<32x1xf32> to vector<32x32xf32>
      %44 = arith.divf %40, %43 : vector<32x32xf32>
      %c0_24 = arith.constant 0 : index
      %c0_25 = arith.constant 0 : index
      %45 = vector.load %arg13[%c0_24, %c0_25] : memref<32x32xf32, #tpu.memory_space<vmem>>, vector<32x32xf32>
      tpu.vector_store %arg13[%c0_24, %c0_25], %44 {strides = array<i32>} : memref<32x32xf32, #tpu.memory_space<vmem>>, vector<32x32xf32>,
      %c0_26 = arith.constant 0 : index
      %c0_27 = arith.constant 0 : index
      %46 = vector.load %arg11[%c0_26, %c0_27] : memref<1x32xf32, #tpu.memory_space<vmem>>, vector<1x32xf32>
      %cst_28 = arith.constant 1.000000e-24 : f32
      %47 = vector.broadcast %cst_28 : f32 to vector<1x32xf32>
      %48 = arith.maximumf %46, %47 : vector<1x32xf32>
      %49 = math.rsqrt %48 : vector<1x32xf32>
      %c0_29 = arith.constant 0 : index
      %c0_30 = arith.constant 0 : index
      %50 = vector.load %arg12[%c0_29, %c0_30] : memref<1x32xf32, #tpu.memory_space<vmem>>, vector<1x32xf32>
      %cst_31 = arith.constant 1.000000e-24 : f32
      %51 = vector.broadcast %cst_31 : f32 to vector<1x32xf32>
      %52 = arith.maximumf %50, %51 : vector<1x32xf32>
      %53 = math.rsqrt %52 : vector<1x32xf32>
      %c0_32 = arith.constant 0 : index
      %c0_33 = arith.constant 0 : index
      %54 = vector.load %arg7[%c0_32, %c0_33] : memref<1x32xf32, #tpu.memory_space<vmem>>, vector<1x32xf32>
      %55 = arith.mulf %49, %54 : vector<1x32xf32>
      %56 = tpu.transpose %55, [1, 0] : vector<1x32xf32> -> vector<32x1xf32>
      %c0_34 = arith.constant 0 : index
      %c0_35 = arith.constant 0 : index
      %57 = vector.load %arg14[%c0_34, %c0_35] : memref<32x32xf32, #tpu.memory_space<vmem>>, vector<32x32xf32>
      %58 = vector.broadcast %53 : vector<1x32xf32> to vector<32x32xf32>
      %59 = arith.mulf %57, %58 : vector<32x32xf32>
      %60 = vector.broadcast %56 : vector<32x1xf32> to vector<32x32xf32>
      %61 = arith.mulf %59, %60 : vector<32x32xf32>
      %c0_36 = arith.constant 0 : index
      %c0_37 = arith.constant 0 : index
      %62 = vector.load %arg5[%c0_36, %c0_37] : memref<32x32xf32, #tpu.memory_space<vmem>>, vector<32x32xf32>
      %63 = arith.addf %61, %62 : vector<32x32xf32>
      %cst_38 = arith.constant dense<0xFF800000> : vector<32xf32>
      %64 = vector.multi_reduction <maximumf>, %63, %cst_38 [1] : vector<32x32xf32> to vector<32xf32>
      %65 = vector.shape_cast %64 : vector<32xf32> to vector<32x1xf32>
      %66 = vector.broadcast %65 : vector<32x1xf32> to vector<32x32xf32>
      %67 = arith.subf %63, %66 : vector<32x32xf32>
      %68 = math.exp %67 : vector<32x32xf32>
      %cst_39 = arith.constant dense<0.000000e+00> : vector<32xf32>
      %69 = vector.multi_reduction <add>, %68, %cst_39 [1] : vector<32x32xf32> to vector<32xf32>
      %70 = vector.shape_cast %69 : vector<32xf32> to vector<32x1xf32>
      %71 = vector.broadcast %70 : vector<32x1xf32> to vector<32x32xf32>
      %72 = arith.divf %68, %71 : vector<32x32xf32>
      %c0_40 = arith.constant 0 : index
      %c0_41 = arith.constant 0 : index
      %73 = vector.load %arg14[%c0_40, %c0_41] : memref<32x32xf32, #tpu.memory_space<vmem>>, vector<32x32xf32>
      tpu.vector_store %arg14[%c0_40, %c0_41], %72 {strides = array<i32>} : memref<32x32xf32, #tpu.memory_space<vmem>>, vector<32x32xf32>,
    } else {
    }
    %c1_i32_9 = arith.constant 1 : i32
    %15 = arith.cmpi sge, %arg1, %c1_i32_9 : i32
    %16 = arith.extui %15 : i1 to i32
    %c0_i32_10 = arith.constant 0 : i32
    %17 = arith.cmpi ne, %16, %c0_i32_10 : i32
    scf.if %17 {
      %c2 = arith.constant 2 : index
      %c0_11 = arith.constant 0 : index
      %c0_12 = arith.constant 0 : index
      %18 = vector.load %arg4[%c2, %c0_11, %c0_12] : memref<3x32x32xbf16, #tpu.memory_space<vmem>>, vector<1x32x32xbf16>
      %19 = vector.shape_cast %18 : vector<1x32x32xbf16> to vector<32x32xbf16>
      %cst = arith.constant dense<0.000000e+00> : vector<8x32xf32>
      %20 = tpu.matmul %5, %19, %cst {dimension_numbers = #tpu.dot_dimension_numbers<[1], [0], [0], [1], [0, 0, 1, 1], [], []>} : vector<8x32xbf16>, vector<32x32xbf16>, vector<8x32xf32> -> vector<8x32xf32>
      %c2_13 = arith.constant 2 : index
      %c0_14 = arith.constant 0 : index
      %c0_15 = arith.constant 0 : index
      %21 = vector.load %arg4[%c2_13, %c0_14, %c0_15] : memref<3x32x32xbf16, #tpu.memory_space<vmem>>, vector<1x32x32xbf16>
      %22 = vector.shape_cast %21 : vector<1x32x32xbf16> to vector<32x32xbf16>
      %cst_16 = arith.constant dense<0.000000e+00> : vector<8x32xf32>
      %23 = tpu.matmul %8, %22, %cst_16 {dimension_numbers = #tpu.dot_dimension_numbers<[1], [0], [0], [1], [0, 0, 1, 1], [], []>} : vector<8x32xbf16>, vector<32x32xbf16>, vector<8x32xf32> -> vector<8x32xf32>
      %c0_17 = arith.constant 0 : index
      %c0_18 = arith.constant 0 : index
      %24 = vector.load %arg13[%c0_17, %c0_18] : memref<32x32xf32, #tpu.memory_space<vmem>>, vector<32x32xf32>
      %25 = arith.truncf %24 : vector<32x32xf32> to vector<32x32xbf16>
      %c0_19 = arith.constant 0 : index
      %c0_20 = arith.constant 0 : index
      %26 = vector.load %arg14[%c0_19, %c0_20] : memref<32x32xf32, #tpu.memory_space<vmem>>, vector<32x32xf32>
      %27 = arith.truncf %26 : vector<32x32xf32> to vector<32x32xbf16>
      %28 = arith.truncf %23 : vector<8x32xf32> to vector<8x32xbf16>
      %cst_21 = arith.constant dense<0.000000e+00> : vector<8x32xf32>
      %29 = tpu.matmul %28, %25, %cst_21 {dimension_numbers = #tpu.dot_dimension_numbers<[1], [1], [0], [0], [0, 0, 1, 0], [], []>} : vector<8x32xbf16>, vector<32x32xbf16>, vector<8x32xf32> -> vector<8x32xf32>
      %30 = arith.truncf %20 : vector<8x32xf32> to vector<8x32xbf16>
      %cst_22 = arith.constant dense<0.000000e+00> : vector<8x32xf32>
      %31 = tpu.matmul %30, %27, %cst_22 {dimension_numbers = #tpu.dot_dimension_numbers<[1], [1], [0], [0], [0, 0, 1, 0], [], []>} : vector<8x32xbf16>, vector<32x32xbf16>, vector<8x32xf32> -> vector<8x32xf32>
      %32 = arith.addf %29, %31 : vector<8x32xf32>
      %c0_23 = arith.constant 0 : index
      %c0_24 = arith.constant 0 : index
      %c0_25 = arith.constant 0 : index
      %33 = vector.load %arg8[%c0_23, %c0_24, %c0_25] : memref<1x8x32xf32, #tpu.memory_space<vmem>>, vector<1x8x32xf32>
      %34 = vector.shape_cast %33 : vector<1x8x32xf32> to vector<8x32xf32>
      %35 = vector.shape_cast %32 : vector<8x32xf32> to vector<1x8x32xf32>
      tpu.vector_store %arg8[%c0_23, %c0_24, %c0_25], %35 {strides = array<i32>} : memref<1x8x32xf32, #tpu.memory_space<vmem>>, vector<1x8x32xf32>,
    } else {
    }
    return
  }
  func.func @transform_0(%arg0: i32, %arg1: i32) -> (i32, i32, i32) {
    %c1_i32 = arith.constant 1 : i32
    %c0_i32 = arith.constant 0 : i32
    %0 = arith.cmpi eq, %c1_i32, %c0_i32 : i32
    %c1_i32_0 = arith.constant 1 : i32
    %1 = arith.select %0, %c1_i32_0, %c1_i32 : i32
    %2 = arith.remsi %arg1, %1 : i32
    %c0_i32_1 = arith.constant 0 : i32
    %3 = arith.cmpi ne, %2, %c0_i32_1 : i32
    %c0_i32_2 = arith.constant 0 : i32
    %4 = arith.cmpi slt, %2, %c0_i32_2 : i32
    %c0_i32_3 = arith.constant 0 : i32
    %5 = arith.cmpi slt, %1, %c0_i32_3 : i32
    %6 = arith.xori %4, %5 : i1
    %7 = arith.andi %6, %3 : i1
    %8 = arith.addi %2, %1 : i32
    %9 = arith.select %7, %8, %2 : i32
    %c0_i32_4 = arith.constant 0 : i32
    %c0_i32_5 = arith.constant 0 : i32
    return %arg0, %9, %c0_i32_4 : i32, i32, i32
  }
  func.func @transform_1(%arg0: i32, %arg1: i32) -> (i32, i32, i32) {
    %c1_i32 = arith.constant 1 : i32
    %c0_i32 = arith.constant 0 : i32
    %0 = arith.cmpi eq, %c1_i32, %c0_i32 : i32
    %c1_i32_0 = arith.constant 1 : i32
    %1 = arith.select %0, %c1_i32_0, %c1_i32 : i32
    %2 = arith.remsi %arg1, %1 : i32
    %c0_i32_1 = arith.constant 0 : i32
    %3 = arith.cmpi ne, %2, %c0_i32_1 : i32
    %c0_i32_2 = arith.constant 0 : i32
    %4 = arith.cmpi slt, %2, %c0_i32_2 : i32
    %c0_i32_3 = arith.constant 0 : i32
    %5 = arith.cmpi slt, %1, %c0_i32_3 : i32
    %6 = arith.xori %4, %5 : i1
    %7 = arith.andi %6, %3 : i1
    %8 = arith.addi %2, %1 : i32
    %9 = arith.select %7, %8, %2 : i32
    %c0_i32_4 = arith.constant 0 : i32
    %c0_i32_5 = arith.constant 0 : i32
    return %arg0, %9, %c0_i32_4 : i32, i32, i32
  }
  func.func @transform_2(%arg0: i32, %arg1: i32) -> (i32, i32, i32) {
    %c0_i32 = arith.constant 0 : i32
    %c0_i32_0 = arith.constant 0 : i32
    %c0_i32_1 = arith.constant 0 : i32
    %c0_i32_2 = arith.constant 0 : i32
    return %c0_i32, %c0_i32_0, %c0_i32_1 : i32, i32, i32
  }
  func.func @transform_3(%arg0: i32, %arg1: i32) -> (i32, i32) {
    %c0_i32 = arith.constant 0 : i32
    %c0_i32_0 = arith.constant 0 : i32
    %c0_i32_1 = arith.constant 0 : i32
    return %c0_i32, %c0_i32_0 : i32, i32
  }
  func.func @transform_4(%arg0: i32, %arg1: i32) -> (i32, i32) {
    %c0_i32 = arith.constant 0 : i32
    %c0_i32_0 = arith.constant 0 : i32
    %c0_i32_1 = arith.constant 0 : i32
    return %c0_i32, %c0_i32_0 : i32, i32
  }
  func.func @transform_5(%arg0: i32, %arg1: i32) -> (i32, i32) {
    %c0_i32 = arith.constant 0 : i32
    %c0_i32_0 = arith.constant 0 : i32
    %c0_i32_1 = arith.constant 0 : i32
    return %c0_i32, %c0_i32_0 : i32, i32
  }
  func.func @transform_6(%arg0: i32, %arg1: i32) -> (i32, i32, i32) {
    %c1_i32 = arith.constant 1 : i32
    %0 = arith.subi %arg1, %c1_i32 : i32
    %c0_i32 = arith.constant 0 : i32
    %1 = arith.maxsi %0, %c0_i32 : i32
    %c0_i32_0 = arith.constant 0 : i32
    %c0_i32_1 = arith.constant 0 : i32
    return %arg0, %1, %c0_i32_0 : i32, i32, i32
  }
}

</mosaic_0001>

<llo_original>
// kernel: tpu_custom_call.1
$region0: #{tpu_custom_call.1}
  #allocation0 [shape = 'u32[]', space=smem, size = 0x4, offset = 0x4, fixed_abs, tag = 'smem constant byte address 0x4 - core index']
  #allocation1 [shape = 'u32[144,128]{1,0:T(1,128)}', space=vmem, size = 0x12000, scoped, tag = 'internal scratch']
  #allocation2 [shape = 'f32[1,32]{1,0:T(1,128)}', space=vmem, size = 0x200, scoped, tag = 'scratch operand']
  #allocation3 [shape = 'f32[1,32]{1,0:T(1,128)}', space=vmem, size = 0x200, scoped, tag = 'scratch operand']
  #allocation4 [shape = 'f32[1,32]{1,0:T(1,128)}', space=vmem, size = 0x200, scoped, tag = 'scratch operand']
  #allocation5 [shape = 'f32[1,32]{1,0:T(1,128)}', space=vmem, size = 0x200, scoped, tag = 'scratch operand']
  #allocation6 [shape = 'f32[32,32]{1,0:T(8,128)}', space=vmem, size = 0x4000, scoped, tag = 'scratch operand']
  #allocation7 [shape = 'f32[32,32]{1,0:T(8,128)}', space=vmem, size = 0x4000, scoped, tag = 'scratch operand']
  %s0 = inlined_call_operand.hbm [shape: f32[2,8,32], index: 0, kind: input, shape index: {}]
  %s1 = inlined_call_operand.hbm [shape: f32[2,8,32], index: 1, kind: input, shape index: {}]
  %s2 = inlined_call_operand.hbm [shape: bf16[3,32,32], index: 2, kind: input, shape index: {}]
  %s3 = inlined_call_operand.hbm [shape: f32[32,32], index: 3, kind: input, shape index: {}]
  %s4 = inlined_call_operand.vmem [shape: f32[1,32], index: 4, kind: input, shape index: {}]
  %s5 = inlined_call_operand.vmem [shape: f32[1,32], index: 5, kind: input, shape index: {}]
  %s6 = inlined_call_operand.hbm [shape: f32[2,8,32], index: 6, kind: output, shape index: {}]
  %s7 = sld [smem:[#allocation0]]
  $region89: #{tpu_custom_call.1} parent=0
    _
  %s9 = ssub.s32 1, %s7
  %s10 = scalar_select 0, %s9, %s7
  $region1: #{tpu_custom_call.1} parent=0
    #allocation8 [shape = 'u8[8192]{0}', space=vmem, size = 0x2000, scoped, tag = 'input window, operand 0']
    #allocation9 [shape = 's32[2]{0}', space=sflag, size = 0x8, scoped, tag = 'scoped memory for tpu_custom_call.1']
    #allocation10 [shape = 's32[2]{0}', space=sflag, size = 0x8, scoped, tag = 'scoped memory for tpu_custom_call.1']
    #allocation11 [shape = 'u8[8192]{0}', space=vmem, size = 0x2000, scoped, tag = 'input window, operand 1']
    #allocation12 [shape = 's32[2]{0}', space=sflag, size = 0x8, scoped, tag = 'scoped memory for tpu_custom_call.1']
    #allocation13 [shape = 'u8[24576]{0}', space=vmem, size = 0x6000, scoped, tag = 'input window, operand 2, single buffered']
    #allocation14 [shape = 'u8[16384]{0}', space=vmem, size = 0x4000, scoped, tag = 'input window, operand 3, single buffered']
    #allocation15 [shape = 's32[1]{0}', space=sflag, size = 0x4, scoped, tag = 'scoped memory for tpu_custom_call.1']
    #allocation16 [shape = 'u8[8192]{0}', space=vmem, size = 0x2000, scoped, tag = 'output window, operand 0']
    %11 = vsyncpa [#allocation9], 0
    %s12 = scalar_lea.sflag [#allocation9], 1
    %13 = vsyncpa %s12, 0
    %14 = vsyncpa [#allocation12], 0
    %s15 = scalar_lea.sflag [#allocation12], 1
    %16 = vsyncpa %s15, 0
    %17 = vsyncpa [#allocation15], 0
    %18 = vsyncpa [#allocation10], 0
    %s19 = scalar_lea.sflag [#allocation10], 1
    %20 = vsyncpa %s19, 0
    loop: start=0, step=1, limit=6
    $region2: #{tpu_custom_call.1} parent=1 // loop_pre_header
      _
    $region3: #{tpu_custom_call.1} parent=1 // loop_header
      %s22 = sphi 0, %s26
      %p23 = scmp.ge.s32.totalorder %s22, 6
      %s29 = sphi 0, %s41
      %s30 = sphi 0, %s37
      %s31 = sphi 0, %s29
      %s32 = sphi 0, %s30
      %s33 = sphi 0, %s31
      %s34 = sphi 0, %s32
      %s44 = sphi 0, %s46
      %s47 = sphi 0, %s44
      %s48 = sphi 0, %s47
      %s64 = sphi 0, %s48
      %s70 = sphi 0, %s72
      %s73 = sphi 0, %s70
      %s74 = sphi 0, %s73
      %s90 = sphi 0, %s74
      %s94 = sphi 0, %s94
      %s96 = sphi 0, %s94
      %s97 = sphi 0, %s96
      %s111 = sphi 0, %s97
      %s115 = sphi 0, %s115
      %s117 = sphi 0, %s115
      %s118 = sphi 0, %s117
      %s132 = sphi 0, %s118
      %s136 = sphi 0, %s136
      %s138 = sphi 0, %s136
      %s139 = sphi 0, %s138
      %s153 = sphi 0, %s139
      %s157 = sphi 0, %s157
      %s159 = sphi 0, %s157
      %s160 = sphi 0, %s159
      %s174 = sphi 0, %s160
      %s188 = sphi 0, %s190
      %s191 = sphi 0, %s188
      %s192 = sphi 0, %s191
      %s208 = sphi 0, %s192
    $region4: #{tpu_custom_call.1} parent=1 // loop_header_branch
      %25 = sbr.rel (%p23) target = $region8
    $region5: #{tpu_custom_call.1} parent=1 // loop_body
      %s27 = ssub.s32 %s22, 1
      %s28 = ssub.s32 %s22, 2
      %s35 = sadd.s32 1, %s30
      %p36 = scmp.ge.s32.totalorder %s35, 2
      %s37 = scalar_select %p36, 0, %s35
      %s38 = sadd.s32 1, %s29
      %s39 = scalar_select %p36, %s38, %s29
      %p40 = scmp.ge.s32.totalorder %s39, 2
      %s41 = scalar_select %p40, 0, %s39
      %s42 = ssub.s32 %s29, %s41
      %p43 = scmp.eq.s32.totalorder %s42, 0
      %s45 = sadd.s32 %s44, 1
      %s46 = scalar_select %p43, %s44, %s45
      %p49 = pneg %p43
      %p50 = scmp.eq.s32.totalorder %s22, 3
      %p51 = por %p49, %p50
      %p52 = scmp.ne.s32.totalorder %s44, %s47
      %p53 = scmp.eq.s32.totalorder %s22, 0
      %p54 = por %p52, %p53
      %p55 = scmp.ne.s32.totalorder %s44, %s47
      %p56 = scmp.eq.s32.totalorder %s27, 3
      %p57 = por %p55, %p56
      %p58 = scmp.ne.s32.totalorder %s47, %s48
      %p59 = scmp.eq.s32.totalorder %s27, 0
      %p60 = por %p58, %p59
      %p61 = scmp.ne.s32.totalorder %s47, %s48
      %p62 = scmp.eq.s32.totalorder %s28, 3
      %p63 = por %p61, %p62
      %p65 = scmp.ne.s32.totalorder %s48, %s64
      %p66 = scmp.eq.s32.totalorder %s28, 0
      %p67 = por %p65, %p66
      %s68 = ssub.s32 %s29, %s41
      %p69 = scmp.eq.s32.totalorder %s68, 0
      %s71 = sadd.s32 %s70, 1
      %s72 = scalar_select %p69, %s70, %s71
      %p75 = pneg %p69
      %p76 = scmp.eq.s32.totalorder %s22, 3
      %p77 = por %p75, %p76
      %p78 = scmp.ne.s32.totalorder %s70, %s73
      %p79 = scmp.eq.s32.totalorder %s22, 0
      %p80 = por %p78, %p79
      %p81 = scmp.ne.s32.totalorder %s70, %s73
      %p82 = scmp.eq.s32.totalorder %s27, 3
      %p83 = por %p81, %p82
      %p84 = scmp.ne.s32.totalorder %s73, %s74
      %p85 = scmp.eq.s32.totalorder %s27, 0
      %p86 = por %p84, %p85
      %p87 = scmp.ne.s32.totalorder %s73, %s74
      %p88 = scmp.eq.s32.totalorder %s28, 3
      %p89 = por %p87, %p88
      %p91 = scmp.ne.s32.totalorder %s74, %s90
      %p92 = scmp.eq.s32.totalorder %s28, 0
      %p93 = por %p91, %p92
      %s95 = sadd.s32 %s94, 1
      %p98 = scmp.eq.s32.totalorder %s22, 3
      %p99 = scmp.ne.s32.totalorder %s94, %s96
      %p100 = scmp.eq.s32.totalorder %s22, 0
      %p101 = por %p99, %p100
      %p102 = scmp.ne.s32.totalorder %s94, %s96
      %p103 = scmp.eq.s32.totalorder %s27, 3
      %p104 = por %p102, %p103
      %p105 = scmp.ne.s32.totalorder %s96, %s97
      %p106 = scmp.eq.s32.totalorder %s27, 0
      %p107 = por %p105, %p106
      %p108 = scmp.ne.s32.totalorder %s96, %s97
      %p109 = scmp.eq.s32.totalorder %s28, 3
      %p110 = por %p108, %p109
      %p112 = scmp.ne.s32.totalorder %s97, %s111
      %p113 = scmp.eq.s32.totalorder %s28, 0
      %p114 = por %p112, %p113
      %s116 = sadd.s32 %s115, 1
      %p119 = scmp.eq.s32.totalorder %s22, 3
      %p120 = scmp.ne.s32.totalorder %s115, %s117
      %p121 = scmp.eq.s32.totalorder %s22, 0
      %p122 = por %p120, %p121
      %p123 = scmp.ne.s32.totalorder %s115, %s117
      %p124 = scmp.eq.s32.totalorder %s27, 3
      %p125 = por %p123, %p124
      %p126 = scmp.ne.s32.totalorder %s117, %s118
      %p127 = scmp.eq.s32.totalorder %s27, 0
      %p128 = por %p126, %p127
      %p129 = scmp.ne.s32.totalorder %s117, %s118
      %p130 = scmp.eq.s32.totalorder %s28, 3
      %p131 = por %p129, %p130
      %p133 = scmp.ne.s32.totalorder %s118, %s132
      %p134 = scmp.eq.s32.totalorder %s28, 0
      %p135 = por %p133, %p134
      %s137 = sadd.s32 %s136, 1
      %p140 = scmp.eq.s32.totalorder %s22, 3
      %p141 = scmp.ne.s32.totalorder %s136, %s138
      %p142 = scmp.eq.s32.totalorder %s22, 0
      %p143 = por %p141, %p142
      %p144 = scmp.ne.s32.totalorder %s136, %s138
      %p145 = scmp.eq.s32.totalorder %s27, 3
      %p146 = por %p144, %p145
      %p147 = scmp.ne.s32.totalorder %s138, %s139
      %p148 = scmp.eq.s32.totalorder %s27, 0
      %p149 = por %p147, %p148
      %p150 = scmp.ne.s32.totalorder %s138, %s139
      %p151 = scmp.eq.s32.totalorder %s28, 3
      %p152 = por %p150, %p151
      %p154 = scmp.ne.s32.totalorder %s139, %s153
      %p155 = scmp.eq.s32.totalorder %s28, 0
      %p156 = por %p154, %p155
      %s158 = sadd.s32 %s157, 1
      %p161 = scmp.eq.s32.totalorder %s22, 3
      %p162 = scmp.ne.s32.totalorder %s157, %s159
      %p163 = scmp.eq.s32.totalorder %s22, 0
      %p164 = por %p162, %p163
      %p165 = scmp.ne.s32.totalorder %s157, %s159
      %p166 = scmp.eq.s32.totalorder %s27, 3
      %p167 = por %p165, %p166
      %p168 = scmp.ne.s32.totalorder %s159, %s160
      %p169 = scmp.eq.s32.totalorder %s27, 0
      %p170 = por %p168, %p169
      %p171 = scmp.ne.s32.totalorder %s159, %s160
      %p172 = scmp.eq.s32.totalorder %s28, 3
      %p173 = por %p171, %p172
      %p175 = scmp.ne.s32.totalorder %s160, %s174
      %p176 = scmp.eq.s32.totalorder %s28, 0
      %p177 = por %p175, %p176
      %s178 = ssub.s32 %s30, 1
      %p179 = scmp.gt.s32.totalorder %s178, 0
      %s180 = scalar_select %p179, %s178, 0
      %s181 = ssub.s32 %s37, 1
      %p182 = scmp.gt.s32.totalorder %s181, 0
      %s183 = scalar_select %p182, %s181, 0
      %s184 = ssub.s32 %s29, %s41
      %s185 = ssub.s32 %s180, %s183
      %s186 = sor.u32 %s184, %s185
      %p187 = scmp.eq.s32.totalorder %s186, 0
      %s189 = sadd.s32 %s188, 1
      %s190 = scalar_select %p187, %s188, %s189
      %p193 = pneg %p187
      %p194 = scmp.eq.s32.totalorder %s22, 3
      %p195 = por %p193, %p194
      %p196 = scmp.ne.s32.totalorder %s188, %s191
      %p197 = scmp.eq.s32.totalorder %s22, 0
      %p198 = por %p196, %p197
      %p199 = scmp.ne.s32.totalorder %s188, %s191
      %p200 = scmp.eq.s32.totalorder %s27, 3
      %p201 = por %p199, %p200
      %p202 = scmp.ne.s32.totalorder %s191, %s192
      %p203 = scmp.eq.s32.totalorder %s27, 0
      %p204 = por %p202, %p203
      %p205 = scmp.ne.s32.totalorder %s191, %s192
      %p206 = scmp.eq.s32.totalorder %s28, 3
      %p207 = por %p205, %p206
      %p209 = scmp.ne.s32.totalorder %s192, %s208
      %p210 = scmp.eq.s32.totalorder %s28, 0
      %p211 = por %p209, %p210
      %p212 = scmp.le.s32.totalorder 1, %s22
      %p213 = scmp.lt.s32.totalorder %s22, 5
      %p214 = pnand %p212, %p213
      %p215 = pneg %p214
      // Predicated region
      $region9: #{tpu_custom_call.1} parent=5 // pred_check
        _
      $region10: #{tpu_custom_call.1} parent=5 // pred_check_branch
        %217 = sbr.rel (%p214) target = $region12
      $region11: #{tpu_custom_call.1} parent=5 // pred_region
        %s218 = ssub.s32 %s22, 1
        // Predicated region
        $region13: #{tpu_custom_call.1} parent=11 // pred_check
          %p219 = pneg %p107
        $region14: #{tpu_custom_call.1} parent=11 // pred_check_branch
          %221 = sbr.rel (%p219) target = $region16
        $region15: #{tpu_custom_call.1} parent=11 // pred_region
          %s223 = ssub.s32 768, 768
          %224 = vsyncadd [#allocation12], %s223
          %s225 = sshll.u32 [#allocation13], 4
          %s226 = int_to_ptr.vmem [resolvable:$true] %s225
          %231 = dma.hbm_to_vmem [thread:$0]  %s2, 768, %s226, [#allocation12], 64, 64, 4
        $region16: #{tpu_custom_call.1} parent=11 // pred_fallthru
          _
        // Predicated region
        $region17: #{tpu_custom_call.1} parent=11 // pred_check
          %p232 = pneg %p128
        $region18: #{tpu_custom_call.1} parent=11 // pred_check_branch
          %234 = sbr.rel (%p232) target = $region20
        $region19: #{tpu_custom_call.1} parent=11 // pred_region
          %s236 = ssub.s32 512, 512
          %237 = vsyncadd [#allocation15], %s236
          %s238 = sshll.u32 [#allocation14], 4
          %s239 = int_to_ptr.vmem [resolvable:$true] %s238
          %244 = dma.hbm_to_vmem [thread:$0]  %s3, 512, %s239, [#allocation15], 128, 128, 8
        $region20: #{tpu_custom_call.1} parent=11 // pred_fallthru
          _
        // Predicated region
        $region21: #{tpu_custom_call.1} parent=11 // pred_check
          %p245 = pneg %p149
        $region22: #{tpu_custom_call.1} parent=11 // pred_check_branch
          %247 = sbr.rel (%p245) target = $region24
        $region23: #{tpu_custom_call.1} parent=11 // pred_region
          _
        $region24: #{tpu_custom_call.1} parent=11 // pred_fallthru
          _
        // Predicated region
        $region25: #{tpu_custom_call.1} parent=11 // pred_check
          %p248 = pneg %p170
        $region26: #{tpu_custom_call.1} parent=11 // pred_check_branch
          %250 = sbr.rel (%p248) target = $region28
        $region27: #{tpu_custom_call.1} parent=11 // pred_region
          _
        $region28: #{tpu_custom_call.1} parent=11 // pred_fallthru
          _
      $region12: #{tpu_custom_call.1} parent=5 // pred_fallthru
        _
      %p251 = scmp.lt.s32.totalorder %s22, 4
      // Predicated region
      $region29: #{tpu_custom_call.1} parent=5 // pred_check
        %p252 = pneg %p251
      $region30: #{tpu_custom_call.1} parent=5 // pred_check_branch
        %254 = sbr.rel (%p252) target = $region32
      $region31: #{tpu_custom_call.1} parent=5 // pred_region
        // Predicated region
        $region33: #{tpu_custom_call.1} parent=31 // pred_check
          %p255 = pneg %p54
        $region34: #{tpu_custom_call.1} parent=31 // pred_check_branch
          %257 = sbr.rel (%p255) target = $region36
        $region35: #{tpu_custom_call.1} parent=31 // pred_region
          %s258 = sand.u32 %s44, 1
          %s259 = scalar_lea.sflag [#allocation9], %s258
          %s260 = sand.u32 %s44, 1
          %s261 = smul.addr %s260, 8
          %s262 = scalar_lea.vmem [#allocation8], %s261
          %s264 = ssub.s32 128, 128
          %265 = vsyncadd %s259, %s264
          %s266 = smul.addr %s29, 128
          %s267 = scalar_lea.hbm %s0, %s266
          %s269 = sshll.u32 %s262, 4
          %s270 = int_to_ptr.vmem [resolvable:$true] %s269
          %272 = dma.hbm_to_vmem [thread:$0]  %s267, 128, %s270, %s259
        $region36: #{tpu_custom_call.1} parent=31 // pred_fallthru
          _
        // Predicated region
        $region37: #{tpu_custom_call.1} parent=31 // pred_check
          %p273 = pneg %p80
        $region38: #{tpu_custom_call.1} parent=31 // pred_check_branch
          %275 = sbr.rel (%p273) target = $region40
        $region39: #{tpu_custom_call.1} parent=31 // pred_region
          %s276 = sand.u32 %s22, 1
          %s277 = scalar_lea.sflag [#allocation12], %s276
          %s278 = sand.u32 %s70, 1
          %s279 = smul.addr %s278, 8
          %s280 = scalar_lea.vmem [#allocation11], %s279
          %s282 = ssub.s32 128, 128
          %283 = vsyncadd %s277, %s282
          %s284 = smul.addr %s29, 128
          %s285 = scalar_lea.hbm %s1, %s284
          %s287 = sshll.u32 %s280, 4
          %s288 = int_to_ptr.vmem [resolvable:$true] %s287
          %290 = dma.hbm_to_vmem [thread:$0]  %s285, 128, %s288, %s277
        $region40: #{tpu_custom_call.1} parent=31 // pred_fallthru
          _
      $region32: #{tpu_custom_call.1} parent=5 // pred_fallthru
        _
      %p291 = scmp.le.s32.totalorder 1, %s22
      %p292 = scmp.lt.s32.totalorder %s22, 5
      %p293 = pnand %p291, %p292
      %p294 = pneg %p293
      // Predicated region
      $region41: #{tpu_custom_call.1} parent=5 // pred_check
        _
      $region42: #{tpu_custom_call.1} parent=5 // pred_check_branch
        %296 = sbr.rel (%p293) target = $region44
      $region43: #{tpu_custom_call.1} parent=5 // pred_region
        %s297 = ssub.s32 %s22, 1
        %s298 = sand.u32 %s47, 1
        %s299 = scalar_lea.sflag [#allocation9], %s298
        %s300 = sand.u32 %s47, 1
        %s301 = smul.addr %s300, 8
        %s302 = scalar_lea.vmem [#allocation8], %s301
        // Predicated region
        $region45: #{tpu_custom_call.1} parent=43 // pred_check
          %p303 = pneg %p60
        $region46: #{tpu_custom_call.1} parent=43 // pred_check_branch
          %305 = sbr.rel (%p303) target = $region48
        $region47: #{tpu_custom_call.1} parent=43 // pred_region
          %306 = dma.done %s299, 128
        $region48: #{tpu_custom_call.1} parent=43 // pred_fallthru
          _
        %s307 = sand.u32 %s27, 1
        %s308 = scalar_lea.sflag [#allocation12], %s307
        %s309 = sand.u32 %s73, 1
        %s310 = smul.addr %s309, 8
        %s311 = scalar_lea.vmem [#allocation11], %s310
        // Predicated region
        $region49: #{tpu_custom_call.1} parent=43 // pred_check
          %p312 = pneg %p86
        $region50: #{tpu_custom_call.1} parent=43 // pred_check_branch
          %314 = sbr.rel (%p312) target = $region52
        $region51: #{tpu_custom_call.1} parent=43 // pred_region
          %315 = dma.done %s308, 128
        $region52: #{tpu_custom_call.1} parent=43 // pred_fallthru
          _
        // Predicated region
        $region53: #{tpu_custom_call.1} parent=43 // pred_check
          %p316 = pneg %p107
        $region54: #{tpu_custom_call.1} parent=43 // pred_check_branch
          %318 = sbr.rel (%p316) target = $region56
        $region55: #{tpu_custom_call.1} parent=43 // pred_region
          %319 = dma.done [#allocation12], 768
        $region56: #{tpu_custom_call.1} parent=43 // pred_fallthru
          _
        // Predicated region
        $region57: #{tpu_custom_call.1} parent=43 // pred_check
          %p320 = pneg %p128
        $region58: #{tpu_custom_call.1} parent=43 // pred_check_branch
          %322 = sbr.rel (%p320) target = $region60
        $region59: #{tpu_custom_call.1} parent=43 // pred_region
          %323 = dma.done [#allocation15], 512
        $region60: #{tpu_custom_call.1} parent=43 // pred_fallthru
          _
        %s324 = sand.u32 %s47, 1
        %s325 = scalar_lea.sflag [#allocation9], %s324
        %s326 = sand.u32 %s47, 1
        %s327 = smul.addr %s326, 8
        %s328 = scalar_lea.vmem [#allocation8], %s327
        %p329 = pneg %p60
        %p330 = pneg %p57
        %s331 = sand.u32 %s27, 1
        %s332 = scalar_lea.sflag [#allocation12], %s331
        %s333 = sand.u32 %s73, 1
        %s334 = smul.addr %s333, 8
        %s335 = scalar_lea.vmem [#allocation11], %s334
        %p336 = pneg %p86
        %p337 = pneg %p83
        %p338 = pneg %p107
        %p339 = pneg %p104
        %p340 = pneg %p128
        %p341 = pneg %p125
        %p342 = pneg %p149
        %p343 = pneg %p146
        %p344 = pneg %p170
        %p345 = pneg %p167
        %p346 = pneg %p204
        %p347 = pneg %p201
        %s348 = sand.u32 %s191, 1
        %s349 = scalar_lea.sflag [#allocation10], %s348
        %s350 = sand.u32 %s191, 1
        %s351 = smul.addr %s350, 8
        %s352 = scalar_lea.vmem [#allocation16], %s351
        %s353 = ssub.s32 %s32, 1
        %p354 = scmp.gt.s32.totalorder %s353, 0
        %s355 = scalar_select %p354, %s353, 0
        %p357 = scmp.eq.s32.totalorder %s32, 0
        // Predicated region
        $region61: #{tpu_custom_call.1} parent=43 // pred_check
          %p358 = pneg %p357
        $region62: #{tpu_custom_call.1} parent=43 // pred_check_branch
          %360 = sbr.rel (%p358) target = $region64
        $region63: #{tpu_custom_call.1} parent=43 // pred_region
          %vm361 = vcmask 253952
          %362 = vst.msk [vmem:[#allocation2] sm:$0x1] %vm361, 0.0
          %363 = vst.msk [vmem:[#allocation3] sm:$0x1] %vm361, 0.0
          %364 = vst.msk [vmem:[#allocation4] sm:$0x1] %vm361, 0.0
          %365 = vst.msk [vmem:[#allocation5] sm:$0x1] %vm361, 0.0
          %vm366 = vcmask 261120
          %367 = vst.msk [vmem:[#allocation6] sm:$0xff] %vm366, 0.0
          %368 = vst.msk [vmem:[#allocation6 + $0x8] sm:$0xff] %vm366, 0.0
          %369 = vst.msk [vmem:[#allocation6 + $0x10] sm:$0xff] %vm366, 0.0
          %370 = vst.msk [vmem:[#allocation6 + $0x18] sm:$0xff] %vm366, 0.0
          %371 = vst.msk [vmem:[#allocation7] sm:$0xff] %vm366, 0.0
          %372 = vst.msk [vmem:[#allocation7 + $0x8] sm:$0xff] %vm366, 0.0
          %373 = vst.msk [vmem:[#allocation7 + $0x10] sm:$0xff] %vm366, 0.0
          %374 = vst.msk [vmem:[#allocation7 + $0x18] sm:$0xff] %vm366, 0.0
        $region64: #{tpu_custom_call.1} parent=43 // pred_fallthru
          _
        %v375 = vld [vmem:[%s302] sm:$0xff]
        %v376 = vpack.c.bf16 %v375, %v375
        %v377 = vld [vmem:[%s311] sm:$0xff]
        %v378 = vpack.c.bf16 %v377, %v377
        %p379 = scmp.lt.s32.totalorder %s32, 1
        // Predicated region
        $region65: #{tpu_custom_call.1} parent=43 // pred_check
          %p380 = pneg %p379
        $region66: #{tpu_custom_call.1} parent=43 // pred_check_branch
          %382 = sbr.rel (%p380) target = $region68
        $region67: #{tpu_custom_call.1} parent=43 // pred_region
          %v383 = vld [vmem:[#allocation13] sm:$0xf]
          %v384 = vld [vmem:[#allocation13 + $0x4] sm:$0xf]
          %v385 = vld [vmem:[#allocation13 + $0x8] sm:$0xf]
          %v386 = vld [vmem:[#allocation13 + $0xc] sm:$0xf]
          %v391 = vunpack.c.l.b16 %v383
          %v392 = vunpack.c.l.b16 %v384
          %v393 = vunpack.c.l.b16 %v385
          %v394 = vunpack.c.l.b16 %v386
          %v395 = vpack.c.b16 %v392, %v391
          %v396 = vpack.c.b16 %v394, %v393
          %vm399 = vcmask 261120
          %v401 = vsel %vm399, %v376, 0
          %403 = vmatprep.subr.bf16.mxu0 0
          %404 = vmatpush1.bf16.msra.mxu0 %v395
          %405 = vmatprep.subr.bf16.mxu0 0
          %406 = vmatpush1.bf16.msra.mxu0 %v396
          %407 = vmatprep.subr.bf16.mxu0 0
          %408 = vmatpush1.bf16.msra.mxu0 0
          %409 = vmatprep.subr.bf16.mxu0 0
          %410 = vmatpush1.bf16.msra.mxu0 0
          %411 = vmatprep.subr.bf16.mxu0 0
          %412 = vmatpush1.bf16.msra.mxu0 0
          %413 = vmatprep.subr.bf16.mxu0 0
          %414 = vmatpush1.bf16.msra.mxu0 0
          %415 = vmatprep.subr.bf16.mxu0 0
          %416 = vmatpush1.bf16.msra.mxu0 0
          %417 = vmatprep.subr.bf16.mxu0 0
          %418 = vmatpush1.bf16.msra.mxu0 0
          %419 = vmatprep.subr.bf16.mxu0 0
          %420 = vmatpush1.bf16.msra.mxu0 0
          %421 = vmatprep.subr.bf16.mxu0 0
          %422 = vmatpush1.bf16.msra.mxu0 0
          %423 = vmatprep.subr.bf16.mxu0 0
          %424 = vmatpush1.bf16.msra.mxu0 0
          %425 = vmatprep.subr.bf16.mxu0 0
          %426 = vmatpush1.bf16.msra.mxu0 0
          %427 = vmatprep.subr.bf16.mxu0 0
          %428 = vmatpush1.bf16.msra.mxu0 0
          %429 = vmatprep.subr.bf16.mxu0 0
          %430 = vmatpush1.bf16.msra.mxu0 0
          %431 = vmatprep.subr.bf16.mxu0 0
          %432 = vmatpush1.bf16.msra.mxu0 0
          %433 = vmatprep.subr.bf16.mxu0 0
          %434 = vmatpush1.bf16.msra.mxu0 0
          %435 = vmatprep.mubr.bf16.mxu0 0
          %436 = vmatmul.mubr.bf16.gmra.mrb[0].mxu0 %v401
          %v437 = vpop.f32.mrb[0].mxu0
          %v438 = vadd.f32 0.0, %v437
          %v439 = vpop.f32.mrb[0].mxu0
          %v440 = vpop.f32.mrb[0].mxu0
          %v441 = vpop.f32.mrb[0].mxu0
          %442 = vdwg.mxu0
          %s443 = scalar_lea.vmem [#allocation13], 16
          %v444 = vld [vmem:[%s443] sm:$0xf]
          %v445 = vld [vmem:[%s443 + $0x4] sm:$0xf]
          %v446 = vld [vmem:[%s443 + $0x8] sm:$0xf]
          %v447 = vld [vmem:[%s443 + $0xc] sm:$0xf]
          %v452 = vunpack.c.l.b16 %v444
          %v453 = vunpack.c.l.b16 %v445
          %v454 = vunpack.c.l.b16 %v446
          %v455 = vunpack.c.l.b16 %v447
          %v456 = vpack.c.b16 %v453, %v452
          %v457 = vpack.c.b16 %v455, %v454
          %460 = vmatprep.subr.bf16.mxu0 0
          %461 = vmatpush1.bf16.msra.mxu0 %v456
          %462 = vmatprep.subr.bf16.mxu0 0
          %463 = vmatpush1.bf16.msra.mxu0 %v457
          %464 = vmatprep.subr.bf16.mxu0 0
          %465 = vmatpush1.bf16.msra.mxu0 0
          %466 = vmatprep.subr.bf16.mxu0 0
          %467 = vmatpush1.bf16.msra.mxu0 0
          %468 = vmatprep.subr.bf16.mxu0 0
          %469 = vmatpush1.bf16.msra.mxu0 0
          %470 = vmatprep.subr.bf16.mxu0 0
          %471 = vmatpush1.bf16.msra.mxu0 0
          %472 = vmatprep.subr.bf16.mxu0 0
          %473 = vmatpush1.bf16.msra.mxu0 0
          %474 = vmatprep.subr.bf16.mxu0 0
          %475 = vmatpush1.bf16.msra.mxu0 0
          %476 = vmatprep.subr.bf16.mxu0 0
          %477 = vmatpush1.bf16.msra.mxu0 0
          %478 = vmatprep.subr.bf16.mxu0 0
          %479 = vmatpush1.bf16.msra.mxu0 0
          %480 = vmatprep.subr.bf16.mxu0 0
          %481 = vmatpush1.bf16.msra.mxu0 0
          %482 = vmatprep.subr.bf16.mxu0 0
          %483 = vmatpush1.bf16.msra.mxu0 0
          %484 = vmatprep.subr.bf16.mxu0 0
          %485 = vmatpush1.bf16.msra.mxu0 0
          %486 = vmatprep.subr.bf16.mxu0 0
          %487 = vmatpush1.bf16.msra.mxu0 0
          %488 = vmatprep.subr.bf16.mxu0 0
          %489 = vmatpush1.bf16.msra.mxu0 0
          %490 = vmatprep.subr.bf16.mxu0 0
          %491 = vmatpush1.bf16.msra.mxu0 0
          %492 = vmatprep.mubr.bf16.mxu0 0
          %493 = vmatmul.mubr.bf16.gmra.mrb[0].mxu0 %v401
          %v494 = vpop.f32.mrb[0].mxu0
          %v495 = vadd.f32 0.0, %v494
          %v496 = vpop.f32.mrb[0].mxu0
          %v497 = vpop.f32.mrb[0].mxu0
          %v498 = vpop.f32.mrb[0].mxu0
          %499 = vdwg.mxu0
          %v501 = vsel %vm399, %v378, 0
          %503 = vmatprep.subr.bf16.mxu0 0
          %504 = vmatpush1.bf16.msra.mxu0 %v395
          %505 = vmatprep.subr.bf16.mxu0 0
          %506 = vmatpush1.bf16.msra.mxu0 %v396
          %507 = vmatprep.subr.bf16.mxu0 0
          %508 = vmatpush1.bf16.msra.mxu0 0
          %509 = vmatprep.subr.bf16.mxu0 0
          %510 = vmatpush1.bf16.msra.mxu0 0
          %511 = vmatprep.subr.bf16.mxu0 0
          %512 = vmatpush1.bf16.msra.mxu0 0
          %513 = vmatprep.subr.bf16.mxu0 0
          %514 = vmatpush1.bf16.msra.mxu0 0
          %515 = vmatprep.subr.bf16.mxu0 0
          %516 = vmatpush1.bf16.msra.mxu0 0
          %517 = vmatprep.subr.bf16.mxu0 0
          %518 = vmatpush1.bf16.msra.mxu0 0
          %519 = vmatprep.subr.bf16.mxu0 0
          %520 = vmatpush1.bf16.msra.mxu0 0
          %521 = vmatprep.subr.bf16.mxu0 0
          %522 = vmatpush1.bf16.msra.mxu0 0
          %523 = vmatprep.subr.bf16.mxu0 0
          %524 = vmatpush1.bf16.msra.mxu0 0
          %525 = vmatprep.subr.bf16.mxu0 0
          %526 = vmatpush1.bf16.msra.mxu0 0
          %527 = vmatprep.subr.bf16.mxu0 0
          %528 = vmatpush1.bf16.msra.mxu0 0
          %529 = vmatprep.subr.bf16.mxu0 0
          %530 = vmatpush1.bf16.msra.mxu0 0
          %531 = vmatprep.subr.bf16.mxu0 0
          %532 = vmatpush1.bf16.msra.mxu0 0
          %533 = vmatprep.subr.bf16.mxu0 0
          %534 = vmatpush1.bf16.msra.mxu0 0
          %535 = vmatprep.mubr.bf16.mxu0 0
          %536 = vmatmul.mubr.bf16.gmra.mrb[0].mxu0 %v501
          %v537 = vpop.f32.mrb[0].mxu0
          %v538 = vadd.f32 0.0, %v537
          %v539 = vpop.f32.mrb[0].mxu0
          %v540 = vpop.f32.mrb[0].mxu0
          %v541 = vpop.f32.mrb[0].mxu0
          %542 = vdwg.mxu0
          %543 = vmatprep.subr.bf16.mxu0 0
          %544 = vmatpush1.bf16.msra.mxu0 %v456
          %545 = vmatprep.subr.bf16.mxu0 0
          %546 = vmatpush1.bf16.msra.mxu0 %v457
          %547 = vmatprep.subr.bf16.mxu0 0
          %548 = vmatpush1.bf16.msra.mxu0 0
          %549 = vmatprep.subr.bf16.mxu0 0
          %550 = vmatpush1.bf16.msra.mxu0 0
          %551 = vmatprep.subr.bf16.mxu0 0
          %552 = vmatpush1.bf16.msra.mxu0 0
          %553 = vmatprep.subr.bf16.mxu0 0
          %554 = vmatpush1.bf16.msra.mxu0 0
          %555 = vmatprep.subr.bf16.mxu0 0
          %556 = vmatpush1.bf16.msra.mxu0 0
          %557 = vmatprep.subr.bf16.mxu0 0
          %558 = vmatpush1.bf16.msra.mxu0 0
          %559 = vmatprep.subr.bf16.mxu0 0
          %560 = vmatpush1.bf16.msra.mxu0 0
          %561 = vmatprep.subr.bf16.mxu0 0
          %562 = vmatpush1.bf16.msra.mxu0 0
          %563 = vmatprep.subr.bf16.mxu0 0
          %564 = vmatpush1.bf16.msra.mxu0 0
          %565 = vmatprep.subr.bf16.mxu0 0
          %566 = vmatpush1.bf16.msra.mxu0 0
          %567 = vmatprep.subr.bf16.mxu0 0
          %568 = vmatpush1.bf16.msra.mxu0 0
          %569 = vmatprep.subr.bf16.mxu0 0
          %570 = vmatpush1.bf16.msra.mxu0 0
          %571 = vmatprep.subr.bf16.mxu0 0
          %572 = vmatpush1.bf16.msra.mxu0 0
          %573 = vmatprep.subr.bf16.mxu0 0
          %574 = vmatpush1.bf16.msra.mxu0 0
          %575 = vmatprep.mubr.bf16.mxu0 0
          %576 = vmatmul.mubr.bf16.gmra.mrb[0].mxu0 %v501
          %v577 = vpop.f32.mrb[0].mxu0
          %v578 = vadd.f32 0.0, %v577
          %v579 = vpop.f32.mrb[0].mxu0
          %v580 = vpop.f32.mrb[0].mxu0
          %v581 = vpop.f32.mrb[0].mxu0
          %582 = vdwg.mxu0
          %v583 = vld [vmem:[#allocation2] sm:$0x1]
          %v584 = vmul.f32 %v438, %v438
          %v585 = vsel %vm399, %v584, 0.0
          %v586 = vrot.slane %v585, 4
          %v587 = vadd.f32 %v585, %v586
          %v588 = vrot.slane %v587, 2
          %v589 = vadd.f32 %v587, %v588
          %v590 = vrot.slane %v589, 1
          %v591 = vadd.f32 %v589, %v590
          %v592 = vadd.f32 %v583, %v591
          %vm593 = vcmask 253952
          %594 = vst.msk [vmem:[#allocation2] sm:$0x1] %vm593, %v592
          %v595 = vld [vmem:[#allocation3] sm:$0x1]
          %v596 = vmul.f32 %v495, %v495
          %v597 = vsel %vm399, %v596, 0.0
          %v598 = vrot.slane %v597, 4
          %v599 = vadd.f32 %v597, %v598
          %v600 = vrot.slane %v599, 2
          %v601 = vadd.f32 %v599, %v600
          %v602 = vrot.slane %v601, 1
          %v603 = vadd.f32 %v601, %v602
          %v604 = vadd.f32 %v595, %v603
          %605 = vst.msk [vmem:[#allocation3] sm:$0x1] %vm593, %v604
          %v606 = vld [vmem:[#allocation4] sm:$0x1]
          %v607 = vmul.f32 %v538, %v538
          %v608 = vsel %vm399, %v607, 0.0
          %v609 = vrot.slane %v608, 4
          %v610 = vadd.f32 %v608, %v609
          %v611 = vrot.slane %v610, 2
          %v612 = vadd.f32 %v610, %v611
          %v613 = vrot.slane %v612, 1
          %v614 = vadd.f32 %v612, %v613
          %v615 = vadd.f32 %v606, %v614
          %616 = vst.msk [vmem:[#allocation4] sm:$0x1] %vm593, %v615
          %v617 = vld [vmem:[#allocation5] sm:$0x1]
          %v618 = vmul.f32 %v578, %v578
          %v619 = vsel %vm399, %v618, 0.0
          %v620 = vrot.slane %v619, 4
          %v621 = vadd.f32 %v619, %v620
          %v622 = vrot.slane %v621, 2
          %v623 = vadd.f32 %v621, %v622
          %v624 = vrot.slane %v623, 1
          %v625 = vadd.f32 %v623, %v624
          %v626 = vadd.f32 %v617, %v625
          %627 = vst.msk [vmem:[#allocation5] sm:$0x1] %vm593, %v626
          %v628 = vld [vmem:[#allocation6] sm:$0xff]
          %v629 = vld [vmem:[#allocation6 + $0x8] sm:$0xff]
          %v630 = vld [vmem:[#allocation6 + $0x10] sm:$0xff]
          %v631 = vld [vmem:[#allocation6 + $0x18] sm:$0xff]
          %v632 = vpack.c.bf16 %v438, %v438
          %v633 = vpack.c.bf16 %v495, %v495
          %634 = vxpose.xlu0.c.b16.start [1/8] %v632, 128
          %635 = vxpose.xlu0.c.b16.cont [2/8] 0, 128
          %636 = vxpose.xlu0.c.b16.cont [3/8] 0, 128
          %637 = vxpose.xlu0.c.b16.cont [4/8] 0, 128
          %638 = vxpose.xlu0.c.b16.cont [5/8] 0, 128
          %639 = vxpose.xlu0.c.b16.cont [6/8] 0, 128
          %640 = vxpose.xlu0.c.b16.cont [7/8] 0, 128
          %641 = vxpose.xlu0.c.b16.end [8/8] 0, 128
          %v642 = vpop.trf.xlu0
          %v643 = vpop.trf.xlu0
          %v644 = vpop.trf.xlu0
          %v645 = vpop.trf.xlu0
          %v646 = vpop.trf.xlu0
          %v647 = vpop.trf.xlu0
          %v648 = vpop.trf.xlu0
          %v649 = vpop.trf.xlu0
          %vm650 = vcmask 64512
          %v652 = vsel %vm650, %v642, 0
          %v655 = vsel %vm650, %v643, 0
          %vm657 = vcmask 1043456
          %v659 = vsel %vm657, %v633, 0
          %661 = vmatprep.subr.bf16.mxu0 0
          %662 = vmatpush1.bf16.msra.mxu0 %v659
          %663 = vmatprep.subr.bf16.mxu0 0
          %664 = vmatpush1.bf16.msra.mxu0 0
          %665 = vmatprep.subr.bf16.mxu0 0
          %666 = vmatpush1.bf16.msra.mxu0 0
          %667 = vmatprep.subr.bf16.mxu0 0
          %668 = vmatpush1.bf16.msra.mxu0 0
          %669 = vmatprep.subr.bf16.mxu0 0
          %670 = vmatpush1.bf16.msra.mxu0 0
          %671 = vmatprep.subr.bf16.mxu0 0
          %672 = vmatpush1.bf16.msra.mxu0 0
          %673 = vmatprep.subr.bf16.mxu0 0
          %674 = vmatpush1.bf16.msra.mxu0 0
          %675 = vmatprep.subr.bf16.mxu0 0
          %676 = vmatpush1.bf16.msra.mxu0 0
          %677 = vmatprep.subr.bf16.mxu0 0
          %678 = vmatpush1.bf16.msra.mxu0 0
          %679 = vmatprep.subr.bf16.mxu0 0
          %680 = vmatpush1.bf16.msra.mxu0 0
          %681 = vmatprep.subr.bf16.mxu0 0
          %682 = vmatpush1.bf16.msra.mxu0 0
          %683 = vmatprep.subr.bf16.mxu0 0
          %684 = vmatpush1.bf16.msra.mxu0 0
          %685 = vmatprep.subr.bf16.mxu0 0
          %686 = vmatpush1.bf16.msra.mxu0 0
          %687 = vmatprep.subr.bf16.mxu0 0
          %688 = vmatpush1.bf16.msra.mxu0 0
          %689 = vmatprep.subr.bf16.mxu0 0
          %690 = vmatpush1.bf16.msra.mxu0 0
          %691 = vmatprep.subr.bf16.mxu0 0
          %692 = vmatpush1.bf16.msra.mxu0 0
          %693 = vmatprep.mubr.bf16.mxu0 0
          %694 = vmatmul.mubr.bf16.gmra.mrb[0].mxu0 %v652
          %v695 = vpop.f32.mrb[0].mxu0
          %v696 = vadd.f32 0.0, %v695
          %v697 = vpop.f32.mrb[0].mxu0
          %v698 = vpop.f32.mrb[0].mxu0
          %v699 = vadd.f32 0.0, %v698
          %v700 = vpop.f32.mrb[0].mxu0
          %701 = vmatprep.mubr.bf16.mxu0 0
          %702 = vmatmul.mubr.bf16.gmra.mrb[0].mxu0 %v655
          %v703 = vpop.f32.mrb[0].mxu0
          %v704 = vadd.f32 0.0, %v703
          %v705 = vpop.f32.mrb[0].mxu0
          %v706 = vpop.f32.mrb[0].mxu0
          %v707 = vadd.f32 0.0, %v706
          %v708 = vpop.f32.mrb[0].mxu0
          %709 = vdwg.mxu0
          %v710 = vadd.f32 %v628, %v696
          %v711 = vadd.f32 %v629, %v699
          %v712 = vadd.f32 %v630, %v704
          %v713 = vadd.f32 %v631, %v707
          %714 = vst.msk [vmem:[#allocation6] sm:$0xff] %vm399, %v710
          %715 = vst.msk [vmem:[#allocation6 + $0x8] sm:$0xff] %vm399, %v711
          %716 = vst.msk [vmem:[#allocation6 + $0x10] sm:$0xff] %vm399, %v712
          %717 = vst.msk [vmem:[#allocation6 + $0x18] sm:$0xff] %vm399, %v713
          %v718 = vld [vmem:[#allocation7] sm:$0xff]
          %v719 = vld [vmem:[#allocation7 + $0x8] sm:$0xff]
          %v720 = vld [vmem:[#allocation7 + $0x10] sm:$0xff]
          %v721 = vld [vmem:[#allocation7 + $0x18] sm:$0xff]
          %v722 = vpack.c.bf16 %v538, %v538
          %v723 = vpack.c.bf16 %v578, %v578
          %724 = vxpose.xlu0.c.b16.start [1/8] %v722, 128
          %725 = vxpose.xlu0.c.b16.cont [2/8] 0, 128
          %726 = vxpose.xlu0.c.b16.cont [3/8] 0, 128
          %727 = vxpose.xlu0.c.b16.cont [4/8] 0, 128
          %728 = vxpose.xlu0.c.b16.cont [5/8] 0, 128
          %729 = vxpose.xlu0.c.b16.cont [6/8] 0, 128
          %730 = vxpose.xlu0.c.b16.cont [7/8] 0, 128
          %731 = vxpose.xlu0.c.b16.end [8/8] 0, 128
          %v732 = vpop.trf.xlu0
          %v733 = vpop.trf.xlu0
          %v734 = vpop.trf.xlu0
          %v735 = vpop.trf.xlu0
          %v736 = vpop.trf.xlu0
          %v737 = vpop.trf.xlu0
          %v738 = vpop.trf.xlu0
          %v739 = vpop.trf.xlu0
          %v741 = vsel %vm650, %v732, 0
          %v744 = vsel %vm650, %v733, 0
          %v747 = vsel %vm657, %v723, 0
          %749 = vmatprep.subr.bf16.mxu0 0
          %750 = vmatpush1.bf16.msra.mxu0 %v747
          %751 = vmatprep.subr.bf16.mxu0 0
          %752 = vmatpush1.bf16.msra.mxu0 0
          %753 = vmatprep.subr.bf16.mxu0 0
          %754 = vmatpush1.bf16.msra.mxu0 0
          %755 = vmatprep.subr.bf16.mxu0 0
          %756 = vmatpush1.bf16.msra.mxu0 0
          %757 = vmatprep.subr.bf16.mxu0 0
          %758 = vmatpush1.bf16.msra.mxu0 0
          %759 = vmatprep.subr.bf16.mxu0 0
          %760 = vmatpush1.bf16.msra.mxu0 0
          %761 = vmatprep.subr.bf16.mxu0 0
          %762 = vmatpush1.bf16.msra.mxu0 0
          %763 = vmatprep.subr.bf16.mxu0 0
          %764 = vmatpush1.bf16.msra.mxu0 0
          %765 = vmatprep.subr.bf16.mxu0 0
          %766 = vmatpush1.bf16.msra.mxu0 0
          %767 = vmatprep.subr.bf16.mxu0 0
          %768 = vmatpush1.bf16.msra.mxu0 0
          %769 = vmatprep.subr.bf16.mxu0 0
          %770 = vmatpush1.bf16.msra.mxu0 0
          %771 = vmatprep.subr.bf16.mxu0 0
          %772 = vmatpush1.bf16.msra.mxu0 0
          %773 = vmatprep.subr.bf16.mxu0 0
          %774 = vmatpush1.bf16.msra.mxu0 0
          %775 = vmatprep.subr.bf16.mxu0 0
          %776 = vmatpush1.bf16.msra.mxu0 0
          %777 = vmatprep.subr.bf16.mxu0 0
          %778 = vmatpush1.bf16.msra.mxu0 0
          %779 = vmatprep.subr.bf16.mxu0 0
          %780 = vmatpush1.bf16.msra.mxu0 0
          %781 = vmatprep.mubr.bf16.mxu0 0
          %782 = vmatmul.mubr.bf16.gmra.mrb[0].mxu0 %v741
          %v783 = vpop.f32.mrb[0].mxu0
          %v784 = vadd.f32 0.0, %v783
          %v785 = vpop.f32.mrb[0].mxu0
          %v786 = vpop.f32.mrb[0].mxu0
          %v787 = vadd.f32 0.0, %v786
          %v788 = vpop.f32.mrb[0].mxu0
          %789 = vmatprep.mubr.bf16.mxu0 0
          %790 = vmatmul.mubr.bf16.gmra.mrb[0].mxu0 %v744
          %v791 = vpop.f32.mrb[0].mxu0
          %v792 = vadd.f32 0.0, %v791
          %v793 = vpop.f32.mrb[0].mxu0
          %v794 = vpop.f32.mrb[0].mxu0
          %v795 = vadd.f32 0.0, %v794
          %v796 = vpop.f32.mrb[0].mxu0
          %797 = vdwg.mxu0
          %v798 = vadd.f32 %v718, %v784
          %v799 = vadd.f32 %v719, %v787
          %v800 = vadd.f32 %v720, %v792
          %v801 = vadd.f32 %v721, %v795
          %802 = vst.msk [vmem:[#allocation7] sm:$0xff] %vm399, %v798
          %803 = vst.msk [vmem:[#allocation7 + $0x8] sm:$0xff] %vm399, %v799
          %804 = vst.msk [vmem:[#allocation7 + $0x10] sm:$0xff] %vm399, %v800
          %805 = vst.msk [vmem:[#allocation7 + $0x18] sm:$0xff] %vm399, %v801
        $region68: #{tpu_custom_call.1} parent=43 // pred_fallthru
          _
        %p806 = scmp.eq.s32.totalorder %s32, 1
        // Predicated region
        $region69: #{tpu_custom_call.1} parent=43 // pred_check
          %p807 = pneg %p806
        $region70: #{tpu_custom_call.1} parent=43 // pred_check_branch
          %809 = sbr.rel (%p807) target = $region72
        $region71: #{tpu_custom_call.1} parent=43 // pred_region
          %v810 = vld [vmem:[#allocation2] sm:$0x1]
          %v811 = vmax.f32 %v810, 1e-24
          %v812 = vrsqrt.pop %v811
          %v813 = vld [vmem:[#allocation3] sm:$0x1]
          %v814 = vmax.f32 %v813, 1e-24
          %v815 = vrsqrt.pop %v814
          %v816 = vld [vmem:[%s4] sm:$0x1]
          %v817 = vmul.f32 %v812, %v816
          %818 = vxpose.xlu0.b32.start [1/16] %v817, 128
          %819 = vxpose.xlu0.b32.cont [2/16] 0.0, 128
          %820 = vxpose.xlu0.b32.cont [3/16] 0.0, 128
          %821 = vxpose.xlu0.b32.cont [4/16] 0.0, 128
          %822 = vxpose.xlu0.b32.cont [5/16] 0.0, 128
          %823 = vxpose.xlu0.b32.cont [6/16] 0.0, 128
          %824 = vxpose.xlu0.b32.cont [7/16] 0.0, 128
          %825 = vxpose.xlu0.b32.cont [8/16] 0.0, 128
          %826 = vxpose.xlu0.b32.cont [9/16] 0.0, 128
          %827 = vxpose.xlu0.b32.cont [10/16] 0.0, 128
          %828 = vxpose.xlu0.b32.cont [11/16] 0.0, 128
          %829 = vxpose.xlu0.b32.cont [12/16] 0.0, 128
          %830 = vxpose.xlu0.b32.cont [13/16] 0.0, 128
          %831 = vxpose.xlu0.b32.cont [14/16] 0.0, 128
          %832 = vxpose.xlu0.b32.cont [15/16] 0.0, 128
          %833 = vxpose.xlu0.b32.end [16/16] 0.0, 128
          %v834 = vpop.trf.xlu0
          %v835 = vpop.trf.xlu0
          %v836 = vpop.trf.xlu0
          %v837 = vpop.trf.xlu0
          %v838 = vpop.trf.xlu0
          %v839 = vpop.trf.xlu0
          %v840 = vpop.trf.xlu0
          %v841 = vpop.trf.xlu0
          %v842 = vpop.trf.xlu0
          %v843 = vpop.trf.xlu0
          %v844 = vpop.trf.xlu0
          %v845 = vpop.trf.xlu0
          %v846 = vpop.trf.xlu0
          %v847 = vpop.trf.xlu0
          %v848 = vpop.trf.xlu0
          %v849 = vpop.trf.xlu0
          %v850 = vld [vmem:[#allocation6] sm:$0xff]
          %v851 = vld [vmem:[#allocation6 + $0x8] sm:$0xff]
          %v852 = vld [vmem:[#allocation6 + $0x10] sm:$0xff]
          %v853 = vld [vmem:[#allocation6 + $0x18] sm:$0xff]
          %v855 = vlaneseq
          %v856 = vshrl.u32 %v855, 7
          %v857 = vsub.s32 0, %v856
          %v858 = vrot.slane %v815, %v857
          %v860 = vmul.f32 %v850, %v858
          %v861 = vmul.f32 %v851, %v858
          %v862 = vmul.f32 %v852, %v858
          %v863 = vmul.f32 %v853, %v858
          %865 = vset.pattern.permute.xlu0 0
          %866 = vperm.xlu0 %865, %v834
          %v867 = vpop.permute.xlu0 %866
          %870 = vset.pattern.permute.xlu0 0
          %871 = vperm.xlu0 %870, %v835
          %v872 = vpop.permute.xlu0 %871
          %875 = vset.pattern.permute.xlu0 0
          %876 = vperm.xlu0 %875, %v836
          %v877 = vpop.permute.xlu0 %876
          %880 = vset.pattern.permute.xlu0 0
          %881 = vperm.xlu0 %880, %v837
          %v882 = vpop.permute.xlu0 %881
          %v884 = vmul.f32 %v860, %v867
          %v885 = vmul.f32 %v861, %v872
          %v886 = vmul.f32 %v862, %v877
          %v887 = vmul.f32 %v863, %v882
          %v888 = vld [vmem:[#allocation14] sm:$0xff]
          %v889 = vld [vmem:[#allocation14 + $0x8] sm:$0xff]
          %v890 = vld [vmem:[#allocation14 + $0x10] sm:$0xff]
          %v891 = vld [vmem:[#allocation14 + $0x18] sm:$0xff]
          %v892 = vadd.f32 %v884, %v888
          %v893 = vadd.f32 %v885, %v889
          %v894 = vadd.f32 %v886, %v890
          %v895 = vadd.f32 %v887, %v891
          %vm896 = vcmask 261120
          %v897 = vsel %vm896, %v892, -inf
          %898 = vmax.xlane.f32.xlu0 %v897
          %v899 = vpop.xlane.xlu0 %898
          %v900 = vsel %vm896, %v893, -inf
          %901 = vmax.xlane.f32.xlu0 %v900
          %v902 = vpop.xlane.xlu0 %901
          %v903 = vsel %vm896, %v894, -inf
          %904 = vmax.xlane.f32.xlu0 %v903
          %v905 = vpop.xlane.xlu0 %904
          %v906 = vsel %vm896, %v895, -inf
          %907 = vmax.xlane.f32.xlu0 %v906
          %v908 = vpop.xlane.xlu0 %907
          %v909 = vsub.f32 %v892, %v899
          %v910 = vsub.f32 %v893, %v902
          %v911 = vsub.f32 %v894, %v905
          %v912 = vsub.f32 %v895, %v908
          %v913 = vmul.f32 %v909, 1.442695
          %v914 = vpow.pop %v913
          %v915 = vmul.f32 %v910, 1.442695
          %v916 = vpow.pop %v915
          %v917 = vmul.f32 %v911, 1.442695
          %v918 = vpow.pop %v917
          %v919 = vmul.f32 %v912, 1.442695
          %v920 = vpow.pop %v919
          %v921 = vsel %vm896, %v914, 0.0
          %922 = vadd.xlane.f32.xlu0 %v921
          %v923 = vpop.xlane.xlu0 %922
          %v924 = vsel %vm896, %v916, 0.0
          %925 = vadd.xlane.f32.xlu0 %v924
          %v926 = vpop.xlane.xlu0 %925
          %v927 = vsel %vm896, %v918, 0.0
          %928 = vadd.xlane.f32.xlu0 %v927
          %v929 = vpop.xlane.xlu0 %928
          %v930 = vsel %vm896, %v920, 0.0
          %931 = vadd.xlane.f32.xlu0 %v930
          %v932 = vpop.xlane.xlu0 %931
          %v933 = vrcp.pop %v923
          %v934 = vmul.f32 %v914, %v933
          %v935 = vrcp.pop %v926
          %v936 = vmul.f32 %v916, %v935
          %v937 = vrcp.pop %v929
          %v938 = vmul.f32 %v918, %v937
          %v939 = vrcp.pop %v932
          %v940 = vmul.f32 %v920, %v939
          %941 = vst.msk [vmem:[#allocation6] sm:$0xff] %vm896, %v934
          %942 = vst.msk [vmem:[#allocation6 + $0x8] sm:$0xff] %vm896, %v936
          %943 = vst.msk [vmem:[#allocation6 + $0x10] sm:$0xff] %vm896, %v938
          %944 = vst.msk [vmem:[#allocation6 + $0x18] sm:$0xff] %vm896, %v940
          %v945 = vld [vmem:[#allocation4] sm:$0x1]
          %v946 = vmax.f32 %v945, 1e-24
          %v947 = vrsqrt.pop %v946
          %v948 = vld [vmem:[#allocation5] sm:$0x1]
          %v949 = vmax.f32 %v948, 1e-24
          %v950 = vrsqrt.pop %v949
          %v951 = vld [vmem:[%s5] sm:$0x1]
          %v952 = vmul.f32 %v947, %v951
          %953 = vxpose.xlu0.b32.start [1/16] %v952, 128
          %954 = vxpose.xlu0.b32.cont [2/16] 0.0, 128
          %955 = vxpose.xlu0.b32.cont [3/16] 0.0, 128
          %956 = vxpose.xlu0.b32.cont [4/16] 0.0, 128
          %957 = vxpose.xlu0.b32.cont [5/16] 0.0, 128
          %958 = vxpose.xlu0.b32.cont [6/16] 0.0, 128
          %959 = vxpose.xlu0.b32.cont [7/16] 0.0, 128
          %960 = vxpose.xlu0.b32.cont [8/16] 0.0, 128
          %961 = vxpose.xlu0.b32.cont [9/16] 0.0, 128
          %962 = vxpose.xlu0.b32.cont [10/16] 0.0, 128
          %963 = vxpose.xlu0.b32.cont [11/16] 0.0, 128
          %964 = vxpose.xlu0.b32.cont [12/16] 0.0, 128
          %965 = vxpose.xlu0.b32.cont [13/16] 0.0, 128
          %966 = vxpose.xlu0.b32.cont [14/16] 0.0, 128
          %967 = vxpose.xlu0.b32.cont [15/16] 0.0, 128
          %968 = vxpose.xlu0.b32.end [16/16] 0.0, 128
          %v969 = vpop.trf.xlu0
          %v970 = vpop.trf.xlu0
          %v971 = vpop.trf.xlu0
          %v972 = vpop.trf.xlu0
          %v973 = vpop.trf.xlu0
          %v974 = vpop.trf.xlu0
          %v975 = vpop.trf.xlu0
          %v976 = vpop.trf.xlu0
          %v977 = vpop.trf.xlu0
          %v978 = vpop.trf.xlu0
          %v979 = vpop.trf.xlu0
          %v980 = vpop.trf.xlu0
          %v981 = vpop.trf.xlu0
          %v982 = vpop.trf.xlu0
          %v983 = vpop.trf.xlu0
          %v984 = vpop.trf.xlu0
          %v985 = vld [vmem:[#allocation7] sm:$0xff]
          %v986 = vld [vmem:[#allocation7 + $0x8] sm:$0xff]
          %v987 = vld [vmem:[#allocation7 + $0x10] sm:$0xff]
          %v988 = vld [vmem:[#allocation7 + $0x18] sm:$0xff]
          %v990 = vlaneseq
          %v991 = vshrl.u32 %v990, 7
          %v992 = vsub.s32 0, %v991
          %v993 = vrot.slane %v950, %v992
          %v995 = vmul.f32 %v985, %v993
          %v996 = vmul.f32 %v986, %v993
          %v997 = vmul.f32 %v987, %v993
          %v998 = vmul.f32 %v988, %v993
          %1000 = vset.pattern.permute.xlu0 0
          %1001 = vperm.xlu0 %1000, %v969
          %v1002 = vpop.permute.xlu0 %1001
          %1005 = vset.pattern.permute.xlu0 0
          %1006 = vperm.xlu0 %1005, %v970
          %v1007 = vpop.permute.xlu0 %1006
          %1010 = vset.pattern.permute.xlu0 0
          %1011 = vperm.xlu0 %1010, %v971
          %v1012 = vpop.permute.xlu0 %1011
          %1015 = vset.pattern.permute.xlu0 0
          %1016 = vperm.xlu0 %1015, %v972
          %v1017 = vpop.permute.xlu0 %1016
          %v1019 = vmul.f32 %v995, %v1002
          %v1020 = vmul.f32 %v996, %v1007
          %v1021 = vmul.f32 %v997, %v1012
          %v1022 = vmul.f32 %v998, %v1017
          %v1023 = vld [vmem:[#allocation14] sm:$0xff]
          %v1024 = vld [vmem:[#allocation14 + $0x8] sm:$0xff]
          %v1025 = vld [vmem:[#allocation14 + $0x10] sm:$0xff]
          %v1026 = vld [vmem:[#allocation14 + $0x18] sm:$0xff]
          %v1027 = vadd.f32 %v1019, %v1023
          %v1028 = vadd.f32 %v1020, %v1024
          %v1029 = vadd.f32 %v1021, %v1025
          %v1030 = vadd.f32 %v1022, %v1026
          %v1031 = vsel %vm896, %v1027, -inf
          %1032 = vmax.xlane.f32.xlu0 %v1031
          %v1033 = vpop.xlane.xlu0 %1032
          %v1034 = vsel %vm896, %v1028, -inf
          %1035 = vmax.xlane.f32.xlu0 %v1034
          %v1036 = vpop.xlane.xlu0 %1035
          %v1037 = vsel %vm896, %v1029, -inf
          %1038 = vmax.xlane.f32.xlu0 %v1037
          %v1039 = vpop.xlane.xlu0 %1038
          %v1040 = vsel %vm896, %v1030, -inf
          %1041 = vmax.xlane.f32.xlu0 %v1040
          %v1042 = vpop.xlane.xlu0 %1041
          %v1043 = vsub.f32 %v1027, %v1033
          %v1044 = vsub.f32 %v1028, %v1036
          %v1045 = vsub.f32 %v1029, %v1039
          %v1046 = vsub.f32 %v1030, %v1042
          %v1047 = vmul.f32 %v1043, 1.442695
          %v1048 = vpow.pop %v1047
          %v1049 = vmul.f32 %v1044, 1.442695
          %v1050 = vpow.pop %v1049
          %v1051 = vmul.f32 %v1045, 1.442695
          %v1052 = vpow.pop %v1051
          %v1053 = vmul.f32 %v1046, 1.442695
          %v1054 = vpow.pop %v1053
          %v1055 = vsel %vm896, %v1048, 0.0
          %1056 = vadd.xlane.f32.xlu0 %v1055
          %v1057 = vpop.xlane.xlu0 %1056
          %v1058 = vsel %vm896, %v1050, 0.0
          %1059 = vadd.xlane.f32.xlu0 %v1058
          %v1060 = vpop.xlane.xlu0 %1059
          %v1061 = vsel %vm896, %v1052, 0.0
          %1062 = vadd.xlane.f32.xlu0 %v1061
          %v1063 = vpop.xlane.xlu0 %1062
          %v1064 = vsel %vm896, %v1054, 0.0
          %1065 = vadd.xlane.f32.xlu0 %v1064
          %v1066 = vpop.xlane.xlu0 %1065
          %v1067 = vrcp.pop %v1057
          %v1068 = vmul.f32 %v1048, %v1067
          %v1069 = vrcp.pop %v1060
          %v1070 = vmul.f32 %v1050, %v1069
          %v1071 = vrcp.pop %v1063
          %v1072 = vmul.f32 %v1052, %v1071
          %v1073 = vrcp.pop %v1066
          %v1074 = vmul.f32 %v1054, %v1073
          %1075 = vst.msk [vmem:[#allocation7] sm:$0xff] %vm896, %v1068
          %1076 = vst.msk [vmem:[#allocation7 + $0x8] sm:$0xff] %vm896, %v1070
          %1077 = vst.msk [vmem:[#allocation7 + $0x10] sm:$0xff] %vm896, %v1072
          %1078 = vst.msk [vmem:[#allocation7 + $0x18] sm:$0xff] %vm896, %v1074
        $region72: #{tpu_custom_call.1} parent=43 // pred_fallthru
          _
        %p1079 = scmp.ge.s32.totalorder %s32, 1
        // Predicated region
        $region73: #{tpu_custom_call.1} parent=43 // pred_check
          %p1080 = pneg %p1079
        $region74: #{tpu_custom_call.1} parent=43 // pred_check_branch
          %1082 = sbr.rel (%p1080) target = $region76
        $region75: #{tpu_custom_call.1} parent=43 // pred_region
          %s1083 = scalar_lea.vmem [#allocation13], 32
          %v1084 = vld [vmem:[%s1083] sm:$0xf]
          %v1085 = vld [vmem:[%s1083 + $0x4] sm:$0xf]
          %v1086 = vld [vmem:[%s1083 + $0x8] sm:$0xf]
          %v1087 = vld [vmem:[%s1083 + $0xc] sm:$0xf]
          %v1092 = vunpack.c.l.b16 %v1084
          %v1093 = vunpack.c.l.b16 %v1085
          %v1094 = vunpack.c.l.b16 %v1086
          %v1095 = vunpack.c.l.b16 %v1087
          %v1096 = vpack.c.b16 %v1093, %v1092
          %v1097 = vpack.c.b16 %v1095, %v1094
          %vm1100 = vcmask 261120
          %v1102 = vsel %vm1100, %v376, 0
          %1104 = vmatprep.subr.bf16.mxu0 0
          %1105 = vmatpush1.bf16.msra.mxu0 %v1096
          %1106 = vmatprep.subr.bf16.mxu0 0
          %1107 = vmatpush1.bf16.msra.mxu0 %v1097
          %1108 = vmatprep.subr.bf16.mxu0 0
          %1109 = vmatpush1.bf16.msra.mxu0 0
          %1110 = vmatprep.subr.bf16.mxu0 0
          %1111 = vmatpush1.bf16.msra.mxu0 0
          %1112 = vmatprep.subr.bf16.mxu0 0
          %1113 = vmatpush1.bf16.msra.mxu0 0
          %1114 = vmatprep.subr.bf16.mxu0 0
          %1115 = vmatpush1.bf16.msra.mxu0 0
          %1116 = vmatprep.subr.bf16.mxu0 0
          %1117 = vmatpush1.bf16.msra.mxu0 0
          %1118 = vmatprep.subr.bf16.mxu0 0
          %1119 = vmatpush1.bf16.msra.mxu0 0
          %1120 = vmatprep.subr.bf16.mxu0 0
          %1121 = vmatpush1.bf16.msra.mxu0 0
          %1122 = vmatprep.subr.bf16.mxu0 0
          %1123 = vmatpush1.bf16.msra.mxu0 0
          %1124 = vmatprep.subr.bf16.mxu0 0
          %1125 = vmatpush1.bf16.msra.mxu0 0
          %1126 = vmatprep.subr.bf16.mxu0 0
          %1127 = vmatpush1.bf16.msra.mxu0 0
          %1128 = vmatprep.subr.bf16.mxu0 0
          %1129 = vmatpush1.bf16.msra.mxu0 0
          %1130 = vmatprep.subr.bf16.mxu0 0
          %1131 = vmatpush1.bf16.msra.mxu0 0
          %1132 = vmatprep.subr.bf16.mxu0 0
          %1133 = vmatpush1.bf16.msra.mxu0 0
          %1134 = vmatprep.subr.bf16.mxu0 0
          %1135 = vmatpush1.bf16.msra.mxu0 0
          %1136 = vmatprep.mubr.bf16.mxu0 0
          %1137 = vmatmul.mubr.bf16.gmra.mrb[0].mxu0 %v1102
          %v1138 = vpop.f32.mrb[0].mxu0
          %v1139 = vadd.f32 0.0, %v1138
          %v1140 = vpop.f32.mrb[0].mxu0
          %v1141 = vpop.f32.mrb[0].mxu0
          %v1142 = vpop.f32.mrb[0].mxu0
          %1143 = vdwg.mxu0
          %v1145 = vsel %vm1100, %v378, 0
          %1147 = vmatprep.subr.bf16.mxu0 0
          %1148 = vmatpush1.bf16.msra.mxu0 %v1096
          %1149 = vmatprep.subr.bf16.mxu0 0
          %1150 = vmatpush1.bf16.msra.mxu0 %v1097
          %1151 = vmatprep.subr.bf16.mxu0 0
          %1152 = vmatpush1.bf16.msra.mxu0 0
          %1153 = vmatprep.subr.bf16.mxu0 0
          %1154 = vmatpush1.bf16.msra.mxu0 0
          %1155 = vmatprep.subr.bf16.mxu0 0
          %1156 = vmatpush1.bf16.msra.mxu0 0
          %1157 = vmatprep.subr.bf16.mxu0 0
          %1158 = vmatpush1.bf16.msra.mxu0 0
          %1159 = vmatprep.subr.bf16.mxu0 0
          %1160 = vmatpush1.bf16.msra.mxu0 0
          %1161 = vmatprep.subr.bf16.mxu0 0
          %1162 = vmatpush1.bf16.msra.mxu0 0
          %1163 = vmatprep.subr.bf16.mxu0 0
          %1164 = vmatpush1.bf16.msra.mxu0 0
          %1165 = vmatprep.subr.bf16.mxu0 0
          %1166 = vmatpush1.bf16.msra.mxu0 0
          %1167 = vmatprep.subr.bf16.mxu0 0
          %1168 = vmatpush1.bf16.msra.mxu0 0
          %1169 = vmatprep.subr.bf16.mxu0 0
          %1170 = vmatpush1.bf16.msra.mxu0 0
          %1171 = vmatprep.subr.bf16.mxu0 0
          %1172 = vmatpush1.bf16.msra.mxu0 0
          %1173 = vmatprep.subr.bf16.mxu0 0
          %1174 = vmatpush1.bf16.msra.mxu0 0
          %1175 = vmatprep.subr.bf16.mxu0 0
          %1176 = vmatpush1.bf16.msra.mxu0 0
          %1177 = vmatprep.subr.bf16.mxu0 0
          %1178 = vmatpush1.bf16.msra.mxu0 0
          %1179 = vmatprep.mubr.bf16.mxu0 0
          %1180 = vmatmul.mubr.bf16.gmra.mrb[0].mxu0 %v1145
          %v1181 = vpop.f32.mrb[0].mxu0
          %v1182 = vadd.f32 0.0, %v1181
          %v1183 = vpop.f32.mrb[0].mxu0
          %v1184 = vpop.f32.mrb[0].mxu0
          %v1185 = vpop.f32.mrb[0].mxu0
          %1186 = vdwg.mxu0
          %v1187 = vld [vmem:[#allocation6] sm:$0xff]
          %v1188 = vld [vmem:[#allocation6 + $0x8] sm:$0xff]
          %v1189 = vld [vmem:[#allocation6 + $0x10] sm:$0xff]
          %v1190 = vld [vmem:[#allocation6 + $0x18] sm:$0xff]
          %v1191 = vpack.c.bf16 %v1188, %v1187
          %v1192 = vpack.c.bf16 %v1190, %v1189
          %v1193 = vld [vmem:[#allocation7] sm:$0xff]
          %v1194 = vld [vmem:[#allocation7 + $0x8] sm:$0xff]
          %v1195 = vld [vmem:[#allocation7 + $0x10] sm:$0xff]
          %v1196 = vld [vmem:[#allocation7 + $0x18] sm:$0xff]
          %v1197 = vpack.c.bf16 %v1194, %v1193
          %v1198 = vpack.c.bf16 %v1196, %v1195
          %v1199 = vpack.c.bf16 %v1182, %v1182
          %v1200 = vpack.c.bf16 %v1139, %v1139
          %v1202 = vsel %vm1100, %v1200, 0
          %v1205 = vsel %vm1100, %v1197, 0
          %v1208 = vsel %vm1100, %v1198, 0
          %1210 = vmatprep.subr.bf16.mxu0 0
          %1211 = vmatpush1.bf16.xpose.msra.mxu0 %v1205
          %1212 = vmatprep.subr.bf16.mxu0 0
          %1213 = vmatpush1.bf16.xpose.msra.mxu0 %v1208
          %1214 = vmatprep.subr.bf16.mxu0 0
          %1215 = vmatpush1.bf16.xpose.msra.mxu0 0
          %1216 = vmatprep.subr.bf16.mxu0 0
          %1217 = vmatpush1.bf16.xpose.msra.mxu0 0
          %1218 = vmatprep.subr.bf16.mxu0 0
          %1219 = vmatpush1.bf16.xpose.msra.mxu0 0
          %1220 = vmatprep.subr.bf16.mxu0 0
          %1221 = vmatpush1.bf16.xpose.msra.mxu0 0
          %1222 = vmatprep.subr.bf16.mxu0 0
          %1223 = vmatpush1.bf16.xpose.msra.mxu0 0
          %1224 = vmatprep.subr.bf16.mxu0 0
          %1225 = vmatpush1.bf16.xpose.msra.mxu0 0
          %1226 = vmatprep.subr.bf16.mxu0 0
          %1227 = vmatpush1.bf16.xpose.msra.mxu0 0
          %1228 = vmatprep.subr.bf16.mxu0 0
          %1229 = vmatpush1.bf16.xpose.msra.mxu0 0
          %1230 = vmatprep.subr.bf16.mxu0 0
          %1231 = vmatpush1.bf16.xpose.msra.mxu0 0
          %1232 = vmatprep.subr.bf16.mxu0 0
          %1233 = vmatpush1.bf16.xpose.msra.mxu0 0
          %1234 = vmatprep.subr.bf16.mxu0 0
          %1235 = vmatpush1.bf16.xpose.msra.mxu0 0
          %1236 = vmatprep.subr.bf16.mxu0 0
          %1237 = vmatpush1.bf16.xpose.msra.mxu0 0
          %1238 = vmatprep.subr.bf16.mxu0 0
          %1239 = vmatpush1.bf16.xpose.msra.mxu0 0
          %1240 = vmatprep.subr.bf16.mxu0 0
          %1241 = vmatpush1.bf16.xpose.msra.mxu0 0
          %1242 = vmatprep.mubr.bf16.mxu0 0
          %1243 = vmatmul.mubr.bf16.gmra.mrb[0].mxu0 %v1202
          %v1244 = vpop.f32.mrb[0].mxu0
          %v1245 = vadd.f32 0.0, %v1244
          %v1246 = vpop.f32.mrb[0].mxu0
          %v1247 = vpop.f32.mrb[0].mxu0
          %v1248 = vpop.f32.mrb[0].mxu0
          %1249 = vdwg.mxu0
          %v1251 = vsel %vm1100, %v1199, 0
          %v1254 = vsel %vm1100, %v1191, 0
          %v1257 = vsel %vm1100, %v1192, 0
          %1259 = vmatprep.subr.bf16.mxu0 0
          %1260 = vmatpush1.bf16.xpose.msra.mxu0 %v1254
          %1261 = vmatprep.subr.bf16.mxu0 0
          %1262 = vmatpush1.bf16.xpose.msra.mxu0 %v1257
          %1263 = vmatprep.subr.bf16.mxu0 0
          %1264 = vmatpush1.bf16.xpose.msra.mxu0 0
          %1265 = vmatprep.subr.bf16.mxu0 0
          %1266 = vmatpush1.bf16.xpose.msra.mxu0 0
          %1267 = vmatprep.subr.bf16.mxu0 0
          %1268 = vmatpush1.bf16.xpose.msra.mxu0 0
          %1269 = vmatprep.subr.bf16.mxu0 0
          %1270 = vmatpush1.bf16.xpose.msra.mxu0 0
          %1271 = vmatprep.subr.bf16.mxu0 0
          %1272 = vmatpush1.bf16.xpose.msra.mxu0 0
          %1273 = vmatprep.subr.bf16.mxu0 0
          %1274 = vmatpush1.bf16.xpose.msra.mxu0 0
          %1275 = vmatprep.subr.bf16.mxu0 0
          %1276 = vmatpush1.bf16.xpose.msra.mxu0 0
          %1277 = vmatprep.subr.bf16.mxu0 0
          %1278 = vmatpush1.bf16.xpose.msra.mxu0 0
          %1279 = vmatprep.subr.bf16.mxu0 0
          %1280 = vmatpush1.bf16.xpose.msra.mxu0 0
          %1281 = vmatprep.subr.bf16.mxu0 0
          %1282 = vmatpush1.bf16.xpose.msra.mxu0 0
          %1283 = vmatprep.subr.bf16.mxu0 0
          %1284 = vmatpush1.bf16.xpose.msra.mxu0 0
          %1285 = vmatprep.subr.bf16.mxu0 0
          %1286 = vmatpush1.bf16.xpose.msra.mxu0 0
          %1287 = vmatprep.subr.bf16.mxu0 0
          %1288 = vmatpush1.bf16.xpose.msra.mxu0 0
          %1289 = vmatprep.subr.bf16.mxu0 0
          %1290 = vmatpush1.bf16.xpose.msra.mxu0 0
          %1291 = vmatprep.mubr.bf16.mxu0 0
          %1292 = vmatmul.mubr.bf16.gmra.mrb[0].mxu0 %v1251
          %v1293 = vpop.f32.mrb[0].mxu0
          %v1294 = vadd.f32 %v1245, %v1293
          %v1295 = vpop.f32.mrb[0].mxu0
          %v1296 = vpop.f32.mrb[0].mxu0
          %v1297 = vpop.f32.mrb[0].mxu0
          %1298 = vdwg.mxu0
          %1299 = vst.msk [vmem:[%s352] sm:$0xff] %vm1100, %v1294
        $region76: #{tpu_custom_call.1} parent=43 // pred_fallthru
          _
        %s1300 = sand.u32 %s191, 1
        %s1301 = scalar_lea.sflag [#allocation10], %s1300
        %s1302 = sand.u32 %s191, 1
        %s1303 = smul.addr %s1302, 8
        %s1304 = scalar_lea.vmem [#allocation16], %s1303
        // Predicated region
        $region77: #{tpu_custom_call.1} parent=43 // pred_check
          %p1305 = pneg %p201
        $region78: #{tpu_custom_call.1} parent=43 // pred_check_branch
          %1307 = sbr.rel (%p1305) target = $region80
        $region79: #{tpu_custom_call.1} parent=43 // pred_region
          %s1308 = ssub.s32 %s32, 1
          %p1309 = scmp.gt.s32.totalorder %s1308, 0
          %s1310 = scalar_select %p1309, %s1308, 0
          %s1312 = ssub.s32 128, 128
          %1313 = vsyncadd %s1301, %s1312
          %s1314 = sadd.s32 %s1310, %s31
          %s1315 = smul.addr %s1314, 128
          %s1316 = scalar_lea.hbm %s6, %s1315
          %s1318 = sshll.u32 %s1304, 4
          %s1319 = int_to_ptr.vmem [resolvable:$true] %s1318
          %1321 = dma.vmem_to_hbm [thread:$0]  %s1319, 128, %s1316, %s1301
        $region80: #{tpu_custom_call.1} parent=43 // pred_fallthru
          _
      $region44: #{tpu_custom_call.1} parent=5 // pred_fallthru
        _
      %p1322 = scmp.le.s32.totalorder 2, %s22
      // Predicated region
      $region81: #{tpu_custom_call.1} parent=5 // pred_check
        %p1323 = pneg %p1322
      $region82: #{tpu_custom_call.1} parent=5 // pred_check_branch
        %1325 = sbr.rel (%p1323) target = $region84
      $region83: #{tpu_custom_call.1} parent=5 // pred_region
        %s1326 = ssub.s32 %s22, 2
        // Predicated region
        $region85: #{tpu_custom_call.1} parent=83 // pred_check
          %p1327 = pneg %p207
        $region86: #{tpu_custom_call.1} parent=83 // pred_check_branch
          %1329 = sbr.rel (%p1327) target = $region88
        $region87: #{tpu_custom_call.1} parent=83 // pred_region
          %s1330 = sand.u32 %s192, 1
          %s1331 = scalar_lea.sflag [#allocation10], %s1330
          %s1332 = sand.u32 %s192, 1
          %s1333 = smul.addr %s1332, 8
          %s1334 = scalar_lea.vmem [#allocation16], %s1333
          %1335 = dma.done %s1331, 128
        $region88: #{tpu_custom_call.1} parent=83 // pred_fallthru
          _
      $region84: #{tpu_custom_call.1} parent=5 // pred_fallthru
        _
    $region6: #{tpu_custom_call.1} parent=1 // loop_footer
      %s26 = sadd.s32 1, %s22
    $region7: #{tpu_custom_call.1} parent=1 // loop_footer_branch
      %21 = sbr.rel target = $region3
    $region8: #{tpu_custom_call.1} parent=1 // loop_exit
      _
    %1336 = vsyncpa [#allocation9], 1
    %s1337 = scalar_lea.sflag [#allocation9], 1
    %1338 = vsyncpa %s1337, 1
    %1339 = vsyncpa [#allocation12], 1
    %s1340 = scalar_lea.sflag [#allocation12], 1
    %1341 = vsyncpa %s1340, 1
    %1342 = vsyncpa [#allocation15], 1
    %1343 = vsyncpa [#allocation10], 1
    %s1344 = scalar_lea.sflag [#allocation10], 1
    %1345 = vsyncpa %s1344, 1

</llo_original>
